<compile_context>
chip_gen: v7x
topology: tpu7x:2x2x1
jax: 0.10.0
libtpu: 0.0.40
codegen_flags: <defaults>
</compile_context>

<pallas_src>
import functools

import jax
import jax.numpy as jnp
from jax.experimental import pallas as pl
from jax.experimental.pallas import tpu as pltpu


# ----------------------------------------------------------------------------
# Helpers
# ----------------------------------------------------------------------------
def _round_up(x, m):
    return ((x + m - 1) // m) * m


def _vmem_capacity_bytes():
    """Per-core VMEM capacity; conservative 64 MiB (v7x per-TC) fallback."""
    try:
        return int(pltpu.get_tpu_info().vmem_capacity_bytes)
    except Exception:
        return 64 << 20


def _choose_chunks(k_total, dh_p, wbytes, budget_bytes):
    """Smallest hidden-chunk count whose weight block(s) fit the VMEM budget."""
    units = dh_p // 128
    for nc in range(1, units + 1):
        if units % nc:
            continue
        tn = dh_p // nc
        bufs = 1 if nc == 1 else 2          # nc > 1: chunk blocks double-buffer
        if bufs * k_total * 4 * tn * wbytes <= budget_bytes:
            return nc, tn
    return units, 128


def _bspec(shape, index_map, buffered=None):
    """BlockSpec, optionally with a pipeline buffer-count hint."""
    if buffered is not None and hasattr(pl, "Buffered"):
        try:
            return pl.BlockSpec(shape, index_map,
                                pipeline_mode=pl.Buffered(buffered))
        except Exception:
            pass
    return pl.BlockSpec(shape, index_map)


def _pick_tb(B, block_b, gate_row_lanes):
    """Batch tile: >=2 tiles when B permits; multiple of 8 unless == B."""
    if block_b is None:
        # Wide gate rows (large d_h) -> smaller batch tile (v7x: 64 MiB/TC).
        block_b = 128 if gate_row_lanes >= 8192 else 256
    if B <= block_b:
        if B >= 16:
            return _round_up(pl.cdiv(B, 2), 8)   # two tiles: 2 TCs + pipelining
        return B                                  # tiny batch: one full tile
    return block_b


# ----------------------------------------------------------------------------
# Kernel
# ----------------------------------------------------------------------------
def _lsthm_kernel(x_ref, h_ref, z_ref, c_ref, wx_ref, wh_ref, wz_ref, b_ref,
                  c_out_ref, h_out_ref, *, tn):
    wdt = wx_ref.dtype
    # Three MXU dots against the resident weight blocks, f32 accumulation,
    # single pre-summed bias.
    sums = (
        jnp.dot(x_ref[...].astype(wdt), wx_ref[...],
                preferred_element_type=jnp.float32)
        + jnp.dot(h_ref[...].astype(wdt), wh_ref[...],
                  preferred_element_type=jnp.float32)
        + jnp.dot(z_ref[...].astype(wdt), wz_ref[...],
                  preferred_element_type=jnp.float32)
        + b_ref[...]
    )

    # Gate ordering follows the PyTorch module: [i, o, f, c_hat].
    # tn is a multiple of 128, so every slice is lane-aligned (no masked EUP
    # work, no masked stores).
    i_t = jax.nn.sigmoid(sums[:, 0 * tn:1 * tn])
    o_t = jax.nn.sigmoid(sums[:, 1 * tn:2 * tn])
    f_t = jax.nn.sigmoid(sums[:, 2 * tn:3 * tn])
    ch_t = jnp.tanh(sums[:, 3 * tn:4 * tn])

    c_t = f_t * c_ref[...].astype(jnp.float32) + i_t * ch_t
    h_t = jnp.tanh(c_t) * o_t

    c_out_ref[...] = c_t.astype(c_out_ref.dtype)
    h_out_ref[...] = h_t.astype(h_out_ref.dtype)


# ----------------------------------------------------------------------------
# One-time parameter preparation (hoisted out of the per-step path)
# ----------------------------------------------------------------------------
def prepare_params(params, weight_dtype=jnp.bfloat16, n_chunks=None,
                   vmem_capacity_bytes=None):
    """Rearrange W/U/V (nn.Linear layout [4*d_h, in]) for the kernel.

    Columns are laid out as [in, n_chunks, 4 gates, tn] (flattened) with d_h
    zero-padded to a lane multiple, so each hidden-chunk block carries its
    four gate slices contiguously and every kernel slice is lane-aligned.
    The three biases are pre-summed (and padded) once.
    """
    d_i = params["W_w"].shape[1]
    d_h = params["U_w"].shape[1]
    d_z = params["V_w"].shape[1]
    assert params["W_w"].shape[0] == 4 * d_h

    dh_p = _round_up(d_h, 128)
    k_total = d_i + d_h + d_z
    wbytes = jnp.dtype(weight_dtype).itemsize

    if vmem_capacity_bytes is None:
        vmem_capacity_bytes = _vmem_capacity_bytes()
    if n_chunks is None:
        n_chunks, tn = _choose_chunks(k_total, dh_p, wbytes,
                                      int(0.6 * vmem_capacity_bytes))
    else:
        assert dh_p % n_chunks == 0 and (dh_p // n_chunks) % 128 == 0
        tn = dh_p // n_chunks

    def prep_w(w):                                  # w: [4*d_h, d_in]
        d_in = w.shape[1]
        wt = w.T.reshape(d_in, 4, d_h)              # [in, gate, hidden]
        wt = jnp.pad(wt, ((0, 0), (0, 0), (0, dh_p - d_h)))
        wt = wt.reshape(d_in, 4, n_chunks, tn).transpose(0, 2, 1, 3)
        return wt.reshape(d_in, n_chunks * 4 * tn).astype(weight_dtype)

    bias = (params["W_b"] + params["U_b"] + params["V_b"]).astype(jnp.float32)
    bias = bias.reshape(4, d_h)
    bias = jnp.pad(bias, ((0, 0), (0, dh_p - d_h)))
    bias = bias.reshape(4, n_chunks, tn).transpose(1, 0, 2)
    bias = bias.reshape(1, n_chunks * 4 * tn)

    return {
        "wx": prep_w(params["W_w"]),
        "wh": prep_w(params["U_w"]),
        "wz": prep_w(params["V_w"]),
        "bias": bias,
        "d_i": d_i, "d_h": d_h, "d_z": d_z,
        "dh_p": dh_p, "tn": tn, "n_chunks": n_chunks,
    }


# ----------------------------------------------------------------------------
# Forward wrapper
# ----------------------------------------------------------------------------
def lsthm_forward(x, cmt1, hmt1, zmt1, prepared, *, block_b=None,
                  alias_cmt1=False):
    """Pallas LSTHM cell. Returns (c_t, h_t), each [B, d_h]."""
    B = x.shape[0]
    wx, wh, wz, bias = (prepared["wx"], prepared["wh"], prepared["wz"],
                        prepared["bias"])
    d_i, d_h, d_z = wx.shape[0], wh.shape[0], wz.shape[0]
    dh_p, tn, nc = prepared["dh_p"], prepared["tn"], prepared["n_chunks"]
    k_total = d_i + d_h + d_z
    out_dtype = cmt1.dtype

    # Pad the carried cell state to the lane-padded hidden width (no-op when
    # d_h is already a multiple of 128 -- the realistic case).
    c_in = cmt1 if dh_p == d_h else jnp.pad(cmt1, ((0, 0), (0, dh_p - d_h)))

    tb = _pick_tb(B, block_b, 4 * tn)
    nb = pl.cdiv(B, tb)
    # Chunk axis OUTER: each weight chunk is DMA'd once while batch tiles
    # stream under it.  nc == 1 -> plain batch grid with a resident weight.
    grid = (nc, nb)

    # VMEM budget: 1x (or 2x when chunk-streamed) weight+bias blocks,
    # 2x (double-buffered) activation / state / output tiles, f32 sums +
    # gate temporaries, plus headroom.  Clamped to the chip's capacity.
    wbytes = jnp.dtype(wx.dtype).itemsize
    cbytes = jnp.dtype(c_in.dtype).itemsize
    obytes = jnp.dtype(out_dtype).itemsize
    abytes = jnp.dtype(x.dtype).itemsize
    w_bufs = 1 if nc == 1 else 2
    need = (w_bufs * (k_total * 4 * tn * wbytes + 4 * tn * 4)
            + 2 * tb * k_total * abytes
            + 2 * tb * tn * cbytes
            + 2 * 2 * tb * tn * obytes
            + 10 * tb * tn * 4
            + (4 << 20))
    cap = _vmem_capacity_bytes()
    vmem_limit = int(min(max(need, 32 << 20), cap - (8 << 20)))

    kernel = functools.partial(_lsthm_kernel, tn=tn)

    def _call(single_buffer_weights):
        w_mode = 1 if (single_buffer_weights and nc == 1) else None
        in_specs = [
            _bspec((tb, d_i), lambda j, i: (i, 0)),            # x batch tile
            _bspec((tb, d_h), lambda j, i: (i, 0)),            # h_{t-1} tile
            _bspec((tb, d_z), lambda j, i: (i, 0)),            # z_{t-1} tile
            _bspec((tb, tn), lambda j, i: (i, j)),             # c_{t-1} tile
            _bspec((d_i, 4 * tn), lambda j, i: (0, j), buffered=w_mode),
            _bspec((d_h, 4 * tn), lambda j, i: (0, j), buffered=w_mode),
            _bspec((d_z, 4 * tn), lambda j, i: (0, j), buffered=w_mode),
            _bspec((1, 4 * tn), lambda j, i: (0, j), buffered=w_mode),
        ]
        out_specs = (
            pl.BlockSpec((tb, tn), lambda j, i: (i, j)),
            pl.BlockSpec((tb, tn), lambda j, i: (i, j)),
        )
        kwargs = {}
        if alias_cmt1:
            kwargs["input_output_aliases"] = {3: 0}   # c_{t-1} buffer -> c_t
        return pl.pallas_call(
            kernel,
            out_shape=(jax.ShapeDtypeStruct((B, dh_p), out_dtype),
                       jax.ShapeDtypeStruct((B, dh_p), out_dtype)),
            grid=grid,
            in_specs=in_specs,
            out_specs=out_specs,
            compiler_params=pltpu.CompilerParams(
                dimension_semantics=("parallel", "parallel"),
                vmem_limit_bytes=vmem_limit),
            **kwargs,
        )(x, hmt1, zmt1, c_in, wx, wh, wz, bias)

    if nc == 1 and hasattr(pl, "Buffered"):
        try:
            c_t, h_t = _call(True)
        except Exception:          # pipeline_mode hint unsupported -> default
            c_t, h_t = _call(False)
    else:
        c_t, h_t = _call(False)

    if dh_p != d_h:
        c_t = c_t[:, :d_h]
        h_t = h_t[:, :d_h]
    return c_t, h_t


# ----------------------------------------------------------------------------
# Pure-JAX reference (mirrors the PyTorch forward) and init
# ----------------------------------------------------------------------------
def lsthm_reference(x, cmt1, hmt1, zmt1, params):
    d_h = hmt1.shape[1]
    sums = (x @ params["W_w"].T + params["W_b"]
            + hmt1 @ params["U_w"].T + params["U_b"]
            + zmt1 @ params["V_w"].T + params["V_b"])
    i_t = jax.nn.sigmoid(sums[:, :d_h])
    o_t = jax.nn.sigmoid(sums[:, d_h:2 * d_h])
    f_t = jax.nn.sigmoid(sums[:, 2 * d_h:3 * d_h])
    ch_t = jnp.tanh(sums[:, 3 * d_h:])
    c_t = f_t * cmt1 + i_t * ch_t
    h_t = jnp.tanh(c_t) * o_t
    return c_t, h_t


def init_params(key, d_i, d_h, d_z):
    """Deterministic init matching nn.Linear shapes (weight: [4*d_h, in])."""
    ks = jax.random.split(key, 6)

    def lin(kw, kb, fan_in):
        bound = 1.0 / jnp.sqrt(fan_in)
        w = jax.random.uniform(kw, (4 * d_h, fan_in), jnp.float32, -bound, bound)
        b = jax.random.uniform(kb, (4 * d_h,), jnp.float32, -bound, bound)
        return w, b

    W_w, W_b = lin(ks[0], ks[1], d_i)
    U_w, U_b = lin(ks[2], ks[3], d_h)
    V_w, V_b = lin(ks[4], ks[5], d_z)
    return {"W_w": W_w, "W_b": W_b,
            "U_w": U_w, "U_b": U_b,
            "V_w": V_w, "V_b": V_b}


def _make_inputs(key, B, d_i, d_h, d_z):
    kp, kx, kc, kh, kz = jax.random.split(key, 5)
    params = init_params(kp, d_i, d_h, d_z)
    x = jax.random.normal(kx, (B, d_i), jnp.float32)
    cmt1 = jax.random.normal(kc, (B, d_h), jnp.float32)
    hmt1 = jax.random.normal(kh, (B, d_h), jnp.float32)
    zmt1 = jax.random.normal(kz, (B, d_z), jnp.float32)
    return params, x, cmt1, hmt1, zmt1


if __name__ == "__main__":
    # 1) Small shapes, f32 weights -> tight check (exact-path correctness).
    params, x, cmt1, hmt1, zmt1 = _make_inputs(jax.random.PRNGKey(0),
                                               B=2, d_i=16, d_h=32, d_z=8)
    prep_f32 = prepare_params(params, weight_dtype=jnp.float32)
    c_t, h_t = lsthm_forward(x, cmt1, hmt1, zmt1, prep_f32)
    jax.block_until_ready((c_t, h_t))
    c_ref, h_ref = lsthm_reference(x, cmt1, hmt1, zmt1, params)
    assert jnp.allclose(c_t, c_ref, atol=1e-4, rtol=1e-4)
    assert jnp.allclose(h_t, h_ref, atol=1e-4, rtol=1e-4)

    # 2) Same shapes, bf16 weights (the production default) -> loose tolerance
    #    (expected bf16 precision loss, not a bug).
    prep_bf16 = prepare_params(params)          # weight_dtype=bfloat16 default
    c_b, h_b = lsthm_forward(x, cmt1, hmt1, zmt1, prep_bf16)
    jax.block_until_ready((c_b, h_b))
    assert jnp.allclose(c_b, c_ref, atol=1e-1, rtol=1e-1)
    assert jnp.allclose(h_b, h_ref, atol=1e-1, rtol=1e-1)

    # 3) Exercise the N-tiled (chunked-weight) path: d_h=256, forced 2 chunks.
    p2, x2, c2, h2, z2 = _make_inputs(jax.random.PRNGKey(1),
                                      B=4, d_i=16, d_h=256, d_z=8)
    prep2 = prepare_params(p2, weight_dtype=jnp.float32, n_chunks=2)
    c_t2, h_t2 = lsthm_forward(x2, c2, h2, z2, prep2)
    jax.block_until_ready((c_t2, h_t2))
    c_ref2, h_ref2 = lsthm_reference(x2, c2, h2, z2, p2)
    assert jnp.allclose(c_t2, c_ref2, atol=1e-4, rtol=1e-4)
    assert jnp.allclose(h_t2, h_ref2, atol=1e-4, rtol=1e-4)

    print("KERNEL_OK")
</pallas_src>

<mosaic_0001>
module attributes {stable_mosaic.version = 11 : i64} {
  func.func @_lsthm_kernel(%arg0: i32, %arg1: i32, %arg2: memref<2x16xf32, #tpu.memory_space<vmem>>, %arg3: memref<2x32xf32, #tpu.memory_space<vmem>>, %arg4: memref<2x8xf32, #tpu.memory_space<vmem>>, %arg5: memref<2x128xf32, #tpu.memory_space<vmem>>, %arg6: memref<16x512xf32, #tpu.memory_space<vmem>>, %arg7: memref<32x512xf32, #tpu.memory_space<vmem>>, %arg8: memref<8x512xf32, #tpu.memory_space<vmem>>, %arg9: memref<1x512xf32, #tpu.memory_space<vmem>>, %arg10: memref<2x128xf32, #tpu.memory_space<vmem>>, %arg11: memref<2x128xf32, #tpu.memory_space<vmem>>) attributes {dimension_semantics = [#tpu.dimension_semantics<parallel>, #tpu.dimension_semantics<parallel>], iteration_bounds = array<i64: 1, 1>, scalar_prefetch = 0 : i64, scratch_operands = 0 : i64, tpu.core_type = #tpu.core_type<tc>, window_params = [{transform_indices = @transform_0, window_bounds = array<i64: 2, 16>}, {transform_indices = @transform_1, window_bounds = array<i64: 2, 32>}, {transform_indices = @transform_2, window_bounds = array<i64: 2, 8>}, {transform_indices = @transform_3, window_bounds = array<i64: 2, 128>}, {pipeline_mode = #tpu.pipeline_mode<synchronous>, transform_indices = @transform_4, window_bounds = array<i64: 16, 512>}, {pipeline_mode = #tpu.pipeline_mode<synchronous>, transform_indices = @transform_5, window_bounds = array<i64: 32, 512>}, {pipeline_mode = #tpu.pipeline_mode<synchronous>, transform_indices = @transform_6, window_bounds = array<i64: 8, 512>}, {pipeline_mode = #tpu.pipeline_mode<synchronous>, transform_indices = @transform_7, window_bounds = array<i64: 1, 512>}, {transform_indices = @transform_8, window_bounds = array<i64: 2, 128>}, {transform_indices = @transform_9, window_bounds = array<i64: 2, 128>}]} {
    %c0 = arith.constant 0 : index
    %c0_0 = arith.constant 0 : index
    %0 = vector.load %arg2[%c0, %c0_0] : memref<2x16xf32, #tpu.memory_space<vmem>>, vector<2x16xf32>
    %c0_1 = arith.constant 0 : index
    %c0_2 = arith.constant 0 : index
    %1 = vector.load %arg6[%c0_1, %c0_2] : memref<16x512xf32, #tpu.memory_space<vmem>>, vector<16x512xf32>
    %cst = arith.constant dense<0.000000e+00> : vector<2x512xf32>
    %2 = tpu.matmul %0, %1, %cst {dimension_numbers = #tpu.dot_dimension_numbers<[1], [0], [0], [1], [0, 0, 1, 1], [], []>} : vector<2x16xf32>, vector<16x512xf32>, vector<2x512xf32> -> vector<2x512xf32>
    %c0_3 = arith.constant 0 : index
    %c0_4 = arith.constant 0 : index
    %3 = vector.load %arg3[%c0_3, %c0_4] : memref<2x32xf32, #tpu.memory_space<vmem>>, vector<2x32xf32>
    %c0_5 = arith.constant 0 : index
    %c0_6 = arith.constant 0 : index
    %4 = vector.load %arg7[%c0_5, %c0_6] : memref<32x512xf32, #tpu.memory_space<vmem>>, vector<32x512xf32>
    %cst_7 = arith.constant dense<0.000000e+00> : vector<2x512xf32>
    %5 = tpu.matmul %3, %4, %cst_7 {dimension_numbers = #tpu.dot_dimension_numbers<[1], [0], [0], [1], [0, 0, 1, 1], [], []>} : vector<2x32xf32>, vector<32x512xf32>, vector<2x512xf32> -> vector<2x512xf32>
    %6 = arith.addf %2, %5 : vector<2x512xf32>
    %c0_8 = arith.constant 0 : index
    %c0_9 = arith.constant 0 : index
    %7 = vector.load %arg4[%c0_8, %c0_9] : memref<2x8xf32, #tpu.memory_space<vmem>>, vector<2x8xf32>
    %c0_10 = arith.constant 0 : index
    %c0_11 = arith.constant 0 : index
    %8 = vector.load %arg8[%c0_10, %c0_11] : memref<8x512xf32, #tpu.memory_space<vmem>>, vector<8x512xf32>
    %cst_12 = arith.constant dense<0.000000e+00> : vector<2x512xf32>
    %9 = tpu.matmul %7, %8, %cst_12 {dimension_numbers = #tpu.dot_dimension_numbers<[1], [0], [0], [1], [0, 0, 1, 1], [], []>} : vector<2x8xf32>, vector<8x512xf32>, vector<2x512xf32> -> vector<2x512xf32>
    %10 = arith.addf %6, %9 : vector<2x512xf32>
    %c0_13 = arith.constant 0 : index
    %c0_14 = arith.constant 0 : index
    %11 = vector.load %arg9[%c0_13, %c0_14] : memref<1x512xf32, #tpu.memory_space<vmem>>, vector<1x512xf32>
    %12 = vector.broadcast %11 : vector<1x512xf32> to vector<2x512xf32>
    %13 = arith.addf %10, %12 : vector<2x512xf32>
    %14 = vector.extract_strided_slice %13 {offsets = [0, 0], sizes = [2, 128], strides = [1, 1]} : vector<2x512xf32> to vector<2x128xf32>
    %15 = arith.negf %14 : vector<2x128xf32>
    %16 = math.exp %15 : vector<2x128xf32>
    %cst_15 = arith.constant 1.000000e+00 : f32
    %17 = vector.broadcast %cst_15 : f32 to vector<2x128xf32>
    %18 = arith.addf %17, %16 : vector<2x128xf32>
    %19 = arith.divf %17, %18 : vector<2x128xf32>
    %20 = vector.extract_strided_slice %13 {offsets = [0, 128], sizes = [2, 128], strides = [1, 1]} : vector<2x512xf32> to vector<2x128xf32>
    %21 = arith.negf %20 : vector<2x128xf32>
    %22 = math.exp %21 : vector<2x128xf32>
    %cst_16 = arith.constant 1.000000e+00 : f32
    %23 = vector.broadcast %cst_16 : f32 to vector<2x128xf32>
    %24 = arith.addf %23, %22 : vector<2x128xf32>
    %25 = arith.divf %23, %24 : vector<2x128xf32>
    %26 = vector.extract_strided_slice %13 {offsets = [0, 256], sizes = [2, 128], strides = [1, 1]} : vector<2x512xf32> to vector<2x128xf32>
    %27 = arith.negf %26 : vector<2x128xf32>
    %28 = math.exp %27 : vector<2x128xf32>
    %cst_17 = arith.constant 1.000000e+00 : f32
    %29 = vector.broadcast %cst_17 : f32 to vector<2x128xf32>
    %30 = arith.addf %29, %28 : vector<2x128xf32>
    %31 = arith.divf %29, %30 : vector<2x128xf32>
    %32 = vector.extract_strided_slice %13 {offsets = [0, 384], sizes = [2, 128], strides = [1, 1]} : vector<2x512xf32> to vector<2x128xf32>
    %33 = math.tanh %32 : vector<2x128xf32>
    %c0_18 = arith.constant 0 : index
    %c0_19 = arith.constant 0 : index
    %34 = vector.load %arg5[%c0_18, %c0_19] : memref<2x128xf32, #tpu.memory_space<vmem>>, vector<2x128xf32>
    %35 = arith.mulf %31, %34 : vector<2x128xf32>
    %36 = arith.mulf %19, %33 : vector<2x128xf32>
    %37 = arith.addf %35, %36 : vector<2x128xf32>
    %38 = math.tanh %37 : vector<2x128xf32>
    %39 = arith.mulf %38, %25 : vector<2x128xf32>
    %c0_20 = arith.constant 0 : index
    %c0_21 = arith.constant 0 : index
    %40 = vector.load %arg10[%c0_20, %c0_21] : memref<2x128xf32, #tpu.memory_space<vmem>>, vector<2x128xf32>
    tpu.vector_store %arg10[%c0_20, %c0_21], %37 {strides = array<i32>} : memref<2x128xf32, #tpu.memory_space<vmem>>, vector<2x128xf32>,
    %c0_22 = arith.constant 0 : index
    %c0_23 = arith.constant 0 : index
    %41 = vector.load %arg11[%c0_22, %c0_23] : memref<2x128xf32, #tpu.memory_space<vmem>>, vector<2x128xf32>
    tpu.vector_store %arg11[%c0_22, %c0_23], %39 {strides = array<i32>} : memref<2x128xf32, #tpu.memory_space<vmem>>, vector<2x128xf32>,
    return
  }
  func.func @transform_0(%arg0: i32, %arg1: i32) -> (i32, i32) {
    %c0_i32 = arith.constant 0 : i32
    %c0_i32_0 = arith.constant 0 : i32
    return %arg1, %c0_i32 : i32, i32
  }
  func.func @transform_1(%arg0: i32, %arg1: i32) -> (i32, i32) {
    %c0_i32 = arith.constant 0 : i32
    %c0_i32_0 = arith.constant 0 : i32
    return %arg1, %c0_i32 : i32, i32
  }
  func.func @transform_2(%arg0: i32, %arg1: i32) -> (i32, i32) {
    %c0_i32 = arith.constant 0 : i32
    %c0_i32_0 = arith.constant 0 : i32
    return %arg1, %c0_i32 : i32, i32
  }
  func.func @transform_3(%arg0: i32, %arg1: i32) -> (i32, i32) {
    %c0_i32 = arith.constant 0 : i32
    return %arg1, %arg0 : i32, i32
  }
  func.func @transform_4(%arg0: i32, %arg1: i32) -> (i32, i32) {
    %c0_i32 = arith.constant 0 : i32
    %c0_i32_0 = arith.constant 0 : i32
    return %c0_i32, %arg0 : i32, i32
  }
  func.func @transform_5(%arg0: i32, %arg1: i32) -> (i32, i32) {
    %c0_i32 = arith.constant 0 : i32
    %c0_i32_0 = arith.constant 0 : i32
    return %c0_i32, %arg0 : i32, i32
  }
  func.func @transform_6(%arg0: i32, %arg1: i32) -> (i32, i32) {
    %c0_i32 = arith.constant 0 : i32
    %c0_i32_0 = arith.constant 0 : i32
    return %c0_i32, %arg0 : i32, i32
  }
  func.func @transform_7(%arg0: i32, %arg1: i32) -> (i32, i32) {
    %c0_i32 = arith.constant 0 : i32
    %c0_i32_0 = arith.constant 0 : i32
    return %c0_i32, %arg0 : i32, i32
  }
  func.func @transform_8(%arg0: i32, %arg1: i32) -> (i32, i32) {
    %c0_i32 = arith.constant 0 : i32
    return %arg1, %arg0 : i32, i32
  }
  func.func @transform_9(%arg0: i32, %arg1: i32) -> (i32, i32) {
    %c0_i32 = arith.constant 0 : i32
    return %arg1, %arg0 : i32, i32
  }
}

module attributes {stable_mosaic.version = 11 : i64} {
  func.func @_lsthm_kernel(%arg0: i32, %arg1: i32, %arg2: memref<2x16xf32, #tpu.memory_space<vmem>>, %arg3: memref<2x32xf32, #tpu.memory_space<vmem>>, %arg4: memref<2x8xf32, #tpu.memory_space<vmem>>, %arg5: memref<2x128xf32, #tpu.memory_space<vmem>>, %arg6: memref<16x512xf32, #tpu.memory_space<vmem>>, %arg7: memref<32x512xf32, #tpu.memory_space<vmem>>, %arg8: memref<8x512xf32, #tpu.memory_space<vmem>>, %arg9: memref<1x512xf32, #tpu.memory_space<vmem>>, %arg10: memref<2x128xf32, #tpu.memory_space<vmem>>, %arg11: memref<2x128xf32, #tpu.memory_space<vmem>>) attributes {dimension_semantics = [#tpu.dimension_semantics<parallel>, #tpu.dimension_semantics<parallel>], iteration_bounds = array<i64: 1, 1>, scalar_prefetch = 0 : i64, scratch_operands = 0 : i64, tpu.core_type = #tpu.core_type<tc>, window_params = [{transform_indices = @transform_0, window_bounds = array<i64: 2, 16>}, {transform_indices = @transform_1, window_bounds = array<i64: 2, 32>}, {transform_indices = @transform_2, window_bounds = array<i64: 2, 8>}, {transform_indices = @transform_3, window_bounds = array<i64: 2, 128>}, {transform_indices = @transform_4, window_bounds = array<i64: 16, 512>}, {transform_indices = @transform_5, window_bounds = array<i64: 32, 512>}, {transform_indices = @transform_6, window_bounds = array<i64: 8, 512>}, {transform_indices = @transform_7, window_bounds = array<i64: 1, 512>}, {transform_indices = @transform_8, window_bounds = array<i64: 2, 128>}, {transform_indices = @transform_9, window_bounds = array<i64: 2, 128>}]} {
    %c0 = arith.constant 0 : index
    %c0_0 = arith.constant 0 : index
    %0 = vector.load %arg2[%c0, %c0_0] : memref<2x16xf32, #tpu.memory_space<vmem>>, vector<2x16xf32>
    %c0_1 = arith.constant 0 : index
    %c0_2 = arith.constant 0 : index
    %1 = vector.load %arg6[%c0_1, %c0_2] : memref<16x512xf32, #tpu.memory_space<vmem>>, vector<16x512xf32>
    %cst = arith.constant dense<0.000000e+00> : vector<2x512xf32>
    %2 = tpu.matmul %0, %1, %cst {dimension_numbers = #tpu.dot_dimension_numbers<[1], [0], [0], [1], [0, 0, 1, 1], [], []>} : vector<2x16xf32>, vector<16x512xf32>, vector<2x512xf32> -> vector<2x512xf32>
    %c0_3 = arith.constant 0 : index
    %c0_4 = arith.constant 0 : index
    %3 = vector.load %arg3[%c0_3, %c0_4] : memref<2x32xf32, #tpu.memory_space<vmem>>, vector<2x32xf32>
    %c0_5 = arith.constant 0 : index
    %c0_6 = arith.constant 0 : index
    %4 = vector.load %arg7[%c0_5, %c0_6] : memref<32x512xf32, #tpu.memory_space<vmem>>, vector<32x512xf32>
    %cst_7 = arith.constant dense<0.000000e+00> : vector<2x512xf32>
    %5 = tpu.matmul %3, %4, %cst_7 {dimension_numbers = #tpu.dot_dimension_numbers<[1], [0], [0], [1], [0, 0, 1, 1], [], []>} : vector<2x32xf32>, vector<32x512xf32>, vector<2x512xf32> -> vector<2x512xf32>
    %6 = arith.addf %2, %5 : vector<2x512xf32>
    %c0_8 = arith.constant 0 : index
    %c0_9 = arith.constant 0 : index
    %7 = vector.load %arg4[%c0_8, %c0_9] : memref<2x8xf32, #tpu.memory_space<vmem>>, vector<2x8xf32>
    %c0_10 = arith.constant 0 : index
    %c0_11 = arith.constant 0 : index
    %8 = vector.load %arg8[%c0_10, %c0_11] : memref<8x512xf32, #tpu.memory_space<vmem>>, vector<8x512xf32>
    %cst_12 = arith.constant dense<0.000000e+00> : vector<2x512xf32>
    %9 = tpu.matmul %7, %8, %cst_12 {dimension_numbers = #tpu.dot_dimension_numbers<[1], [0], [0], [1], [0, 0, 1, 1], [], []>} : vector<2x8xf32>, vector<8x512xf32>, vector<2x512xf32> -> vector<2x512xf32>
    %10 = arith.addf %6, %9 : vector<2x512xf32>
    %c0_13 = arith.constant 0 : index
    %c0_14 = arith.constant 0 : index
    %11 = vector.load %arg9[%c0_13, %c0_14] : memref<1x512xf32, #tpu.memory_space<vmem>>, vector<1x512xf32>
    %12 = vector.broadcast %11 : vector<1x512xf32> to vector<2x512xf32>
    %13 = arith.addf %10, %12 : vector<2x512xf32>
    %14 = vector.extract_strided_slice %13 {offsets = [0, 0], sizes = [2, 128], strides = [1, 1]} : vector<2x512xf32> to vector<2x128xf32>
    %15 = arith.negf %14 : vector<2x128xf32>
    %16 = math.exp %15 : vector<2x128xf32>
    %cst_15 = arith.constant 1.000000e+00 : f32
    %17 = vector.broadcast %cst_15 : f32 to vector<2x128xf32>
    %18 = arith.addf %17, %16 : vector<2x128xf32>
    %19 = arith.divf %17, %18 : vector<2x128xf32>
    %20 = vector.extract_strided_slice %13 {offsets = [0, 128], sizes = [2, 128], strides = [1, 1]} : vector<2x512xf32> to vector<2x128xf32>
    %21 = arith.negf %20 : vector<2x128xf32>
    %22 = math.exp %21 : vector<2x128xf32>
    %cst_16 = arith.constant 1.000000e+00 : f32
    %23 = vector.broadcast %cst_16 : f32 to vector<2x128xf32>
    %24 = arith.addf %23, %22 : vector<2x128xf32>
    %25 = arith.divf %23, %24 : vector<2x128xf32>
    %26 = vector.extract_strided_slice %13 {offsets = [0, 256], sizes = [2, 128], strides = [1, 1]} : vector<2x512xf32> to vector<2x128xf32>
    %27 = arith.negf %26 : vector<2x128xf32>
    %28 = math.exp %27 : vector<2x128xf32>
    %cst_17 = arith.constant 1.000000e+00 : f32
    %29 = vector.broadcast %cst_17 : f32 to vector<2x128xf32>
    %30 = arith.addf %29, %28 : vector<2x128xf32>
    %31 = arith.divf %29, %30 : vector<2x128xf32>
    %32 = vector.extract_strided_slice %13 {offsets = [0, 384], sizes = [2, 128], strides = [1, 1]} : vector<2x512xf32> to vector<2x128xf32>
    %33 = math.tanh %32 : vector<2x128xf32>
    %c0_18 = arith.constant 0 : index
    %c0_19 = arith.constant 0 : index
    %34 = vector.load %arg5[%c0_18, %c0_19] : memref<2x128xf32, #tpu.memory_space<vmem>>, vector<2x128xf32>
    %35 = arith.mulf %31, %34 : vector<2x128xf32>
    %36 = arith.mulf %19, %33 : vector<2x128xf32>
    %37 = arith.addf %35, %36 : vector<2x128xf32>
    %38 = math.tanh %37 : vector<2x128xf32>
    %39 = arith.mulf %38, %25 : vector<2x128xf32>
    %c0_20 = arith.constant 0 : index
    %c0_21 = arith.constant 0 : index
    %40 = vector.load %arg10[%c0_20, %c0_21] : memref<2x128xf32, #tpu.memory_space<vmem>>, vector<2x128xf32>
    tpu.vector_store %arg10[%c0_20, %c0_21], %37 {strides = array<i32>} : memref<2x128xf32, #tpu.memory_space<vmem>>, vector<2x128xf32>,
    %c0_22 = arith.constant 0 : index
    %c0_23 = arith.constant 0 : index
    %41 = vector.load %arg11[%c0_22, %c0_23] : memref<2x128xf32, #tpu.memory_space<vmem>>, vector<2x128xf32>
    tpu.vector_store %arg11[%c0_22, %c0_23], %39 {strides = array<i32>} : memref<2x128xf32, #tpu.memory_space<vmem>>, vector<2x128xf32>,
    return
  }
  func.func @transform_0(%arg0: i32, %arg1: i32) -> (i32, i32) {
    %c0_i32 = arith.constant 0 : i32
    %c0_i32_0 = arith.constant 0 : i32
    return %arg1, %c0_i32 : i32, i32
  }
  func.func @transform_1(%arg0: i32, %arg1: i32) -> (i32, i32) {
    %c0_i32 = arith.constant 0 : i32
    %c0_i32_0 = arith.constant 0 : i32
    return %arg1, %c0_i32 : i32, i32
  }
  func.func @transform_2(%arg0: i32, %arg1: i32) -> (i32, i32) {
    %c0_i32 = arith.constant 0 : i32
    %c0_i32_0 = arith.constant 0 : i32
    return %arg1, %c0_i32 : i32, i32
  }
  func.func @transform_3(%arg0: i32, %arg1: i32) -> (i32, i32) {
    %c0_i32 = arith.constant 0 : i32
    return %arg1, %arg0 : i32, i32
  }
  func.func @transform_4(%arg0: i32, %arg1: i32) -> (i32, i32) {
    %c0_i32 = arith.constant 0 : i32
    %c0_i32_0 = arith.constant 0 : i32
    return %c0_i32, %arg0 : i32, i32
  }
  func.func @transform_5(%arg0: i32, %arg1: i32) -> (i32, i32) {
    %c0_i32 = arith.constant 0 : i32
    %c0_i32_0 = arith.constant 0 : i32
    return %c0_i32, %arg0 : i32, i32
  }
  func.func @transform_6(%arg0: i32, %arg1: i32) -> (i32, i32) {
    %c0_i32 = arith.constant 0 : i32
    %c0_i32_0 = arith.constant 0 : i32
    return %c0_i32, %arg0 : i32, i32
  }
  func.func @transform_7(%arg0: i32, %arg1: i32) -> (i32, i32) {
    %c0_i32 = arith.constant 0 : i32
    %c0_i32_0 = arith.constant 0 : i32
    return %c0_i32, %arg0 : i32, i32
  }
  func.func @transform_8(%arg0: i32, %arg1: i32) -> (i32, i32) {
    %c0_i32 = arith.constant 0 : i32
    return %arg1, %arg0 : i32, i32
  }
  func.func @transform_9(%arg0: i32, %arg1: i32) -> (i32, i32) {
    %c0_i32 = arith.constant 0 : i32
    return %arg1, %arg0 : i32, i32
  }
}

</mosaic_0001>

<llo_original>
// kernel: tpu_custom_call.1
$region0: #{tpu_custom_call.1}
  #allocation0 [shape = 'u32[]', space=smem, size = 0x4, offset = 0x4, fixed_abs, tag = 'smem constant byte address 0x4 - core index']
  #allocation1 [shape = 'u32[144,128]{1,0:T(1,128)}', space=vmem, size = 0x12000, scoped, tag = 'internal scratch']
  %s0 = inlined_call_operand.hbm [shape: f32[2,16], index: 0, kind: input, shape index: {}]
  %s1 = inlined_call_operand.vmem [shape: f32[2,32], index: 1, kind: input, shape index: {}]
  %s2 = inlined_call_operand.hbm [shape: f32[2,8], index: 2, kind: input, shape index: {}]
  %s3 = inlined_call_operand.vmem [shape: f32[2,128], index: 3, kind: input, shape index: {}]
  %s4 = inlined_call_operand.hbm [shape: f32[16,512], index: 4, kind: input, shape index: {}]
  %s5 = inlined_call_operand.hbm [shape: f32[32,512], index: 5, kind: input, shape index: {}]
  %s6 = inlined_call_operand.hbm [shape: f32[8,512], index: 6, kind: input, shape index: {}]
  %s7 = inlined_call_operand.vmem [shape: f32[1,512], index: 7, kind: input, shape index: {}]
  %s8 = inlined_call_operand.hbm [shape: f32[2,128], index: 8, kind: output, shape index: {0}]
  %s9 = inlined_call_operand.hbm [shape: f32[2,128], index: 9, kind: output, shape index: {1}]
  %10 = xla_tuple %s8, %s9
  %s11 = sld [smem:[#allocation0]]
  $region70: #{tpu_custom_call.1} parent=0
    _
  %s13 = ssub.s32 1, %s11
  %s14 = scalar_select 0, %s13, %s11
  $region1: #{tpu_custom_call.1} parent=0
    #allocation2 [shape = 'u8[1024]{0}', space=vmem, size = 0x400, scoped, tag = 'input window, operand 0, single buffered']
    #allocation3 [shape = 's32[1]{0}', space=sflag, size = 0x4, scoped, tag = 'scoped memory for tpu_custom_call.1']
    #allocation4 [shape = 's32[1]{0}', space=sflag, size = 0x4, scoped, tag = 'scoped memory for tpu_custom_call.1']
    #allocation5 [shape = 'u8[1024]{0}', space=vmem, size = 0x400, scoped, tag = 'input window, operand 2, single buffered']
    #allocation6 [shape = 's32[1]{0}', space=sflag, size = 0x4, scoped, tag = 'scoped memory for tpu_custom_call.1']
    #allocation7 [shape = 'u8[32768]{0}', space=vmem, size = 0x8000, scoped, tag = 'input window, operand 4, single buffered']
    #allocation8 [shape = 'u8[65536]{0}', space=vmem, size = 0x10000, scoped, tag = 'input window, operand 5, single buffered']
    #allocation9 [shape = 's32[1]{0}', space=sflag, size = 0x4, scoped, tag = 'scoped memory for tpu_custom_call.1']
    #allocation10 [shape = 'u8[16384]{0}', space=vmem, size = 0x4000, scoped, tag = 'input window, operand 6, single buffered']
    #allocation11 [shape = 'u8[1024]{0}', space=vmem, size = 0x400, scoped, tag = 'output window, operand 0, single buffered']
    #allocation12 [shape = 'u8[1024]{0}', space=vmem, size = 0x400, scoped, tag = 'output window, operand 1, single buffered']
    #allocation13 [shape = 's32[1]{0}', space=sflag, size = 0x4, scoped, tag = 'scoped memory for tpu_custom_call.1']
    %15 = vsyncpa [#allocation3], 0
    %16 = vsyncpa [#allocation6], 0
    %17 = vsyncpa [#allocation9], 0
    %18 = vsyncpa [#allocation4], 0
    %19 = vsyncpa [#allocation13], 0
    // Predicated region
    $region2: #{tpu_custom_call.1} parent=1 // pred_check
      _
    $region3: #{tpu_custom_call.1} parent=1 // pred_check_branch
      %21 = sbr.rel (0) target = $region5
    $region4: #{tpu_custom_call.1} parent=1 // pred_region
      %s23 = ssub.s32 32, 32
      %24 = vsyncadd [#allocation3], %s23
      %s26 = sshll.u32 [#allocation2], 4
      %s27 = int_to_ptr.vmem [resolvable:$true] %s26
      %29 = dma.hbm_to_vmem [thread:$0]  %s0, 32, %s27, [#allocation3]
    $region5: #{tpu_custom_call.1} parent=1 // pred_fallthru
      _
    // Predicated region
    $region6: #{tpu_custom_call.1} parent=1 // pred_check
      _
    $region7: #{tpu_custom_call.1} parent=1 // pred_check_branch
      %31 = sbr.rel (0) target = $region9
    $region8: #{tpu_custom_call.1} parent=1 // pred_region
      _
    $region9: #{tpu_custom_call.1} parent=1 // pred_fallthru
      _
    // Predicated region
    $region10: #{tpu_custom_call.1} parent=1 // pred_check
      _
    $region11: #{tpu_custom_call.1} parent=1 // pred_check_branch
      %33 = sbr.rel (0) target = $region13
    $region12: #{tpu_custom_call.1} parent=1 // pred_region
      %s35 = ssub.s32 32, 32
      %36 = vsyncadd [#allocation6], %s35
      %s38 = sshll.u32 [#allocation5], 4
      %s39 = int_to_ptr.vmem [resolvable:$true] %s38
      %41 = dma.hbm_to_vmem [thread:$0]  %s2, 32, %s39, [#allocation6]
    $region13: #{tpu_custom_call.1} parent=1 // pred_fallthru
      _
    // Predicated region
    $region14: #{tpu_custom_call.1} parent=1 // pred_check
      _
    $region15: #{tpu_custom_call.1} parent=1 // pred_check_branch
      %43 = sbr.rel (0) target = $region17
    $region16: #{tpu_custom_call.1} parent=1 // pred_region
      _
    $region17: #{tpu_custom_call.1} parent=1 // pred_fallthru
      _
    // Predicated region
    $region18: #{tpu_custom_call.1} parent=1 // pred_check
      _
    $region19: #{tpu_custom_call.1} parent=1 // pred_check_branch
      %45 = sbr.rel (0) target = $region21
    $region20: #{tpu_custom_call.1} parent=1 // pred_region
      %s47 = ssub.s32 1024, 1024
      %48 = vsyncadd [#allocation6], %s47
      %s49 = sshll.u32 [#allocation7], 4
      %s50 = int_to_ptr.vmem [resolvable:$true] %s49
      %55 = dma.hbm_to_vmem [thread:$0]  %s4, 1024, %s50, [#allocation6], 512, 512, 32
    $region21: #{tpu_custom_call.1} parent=1 // pred_fallthru
      _
    // Predicated region
    $region22: #{tpu_custom_call.1} parent=1 // pred_check
      _
    $region23: #{tpu_custom_call.1} parent=1 // pred_check_branch
      %57 = sbr.rel (0) target = $region25
    $region24: #{tpu_custom_call.1} parent=1 // pred_region
      %s59 = ssub.s32 2048, 2048
      %60 = vsyncadd [#allocation9], %s59
      %s61 = sshll.u32 [#allocation8], 4
      %s62 = int_to_ptr.vmem [resolvable:$true] %s61
      %67 = dma.hbm_to_vmem [thread:$0]  %s5, 2048, %s62, [#allocation9], 512, 512, 32
    $region25: #{tpu_custom_call.1} parent=1 // pred_fallthru
      _
    // Predicated region
    $region26: #{tpu_custom_call.1} parent=1 // pred_check
      _
    $region27: #{tpu_custom_call.1} parent=1 // pred_check_branch
      %69 = sbr.rel (0) target = $region29
    $region28: #{tpu_custom_call.1} parent=1 // pred_region
      %s71 = ssub.s32 512, 512
      %72 = vsyncadd [#allocation9], %s71
      %s74 = sshll.u32 [#allocation10], 4
      %s75 = int_to_ptr.vmem [resolvable:$true] %s74
      %77 = dma.hbm_to_vmem [thread:$0]  %s6, 512, %s75, [#allocation9]
    $region29: #{tpu_custom_call.1} parent=1 // pred_fallthru
      _
    // Predicated region
    $region30: #{tpu_custom_call.1} parent=1 // pred_check
      _
    $region31: #{tpu_custom_call.1} parent=1 // pred_check_branch
      %79 = sbr.rel (0) target = $region33
    $region32: #{tpu_custom_call.1} parent=1 // pred_region
      _
    $region33: #{tpu_custom_call.1} parent=1 // pred_fallthru
      _
    // Predicated region
    $region34: #{tpu_custom_call.1} parent=1 // pred_check
      _
    $region35: #{tpu_custom_call.1} parent=1 // pred_check_branch
      %81 = sbr.rel (0) target = $region37
    $region36: #{tpu_custom_call.1} parent=1 // pred_region
      %82 = dma.done [#allocation3], 32
    $region37: #{tpu_custom_call.1} parent=1 // pred_fallthru
      _
    // Predicated region
    $region38: #{tpu_custom_call.1} parent=1 // pred_check
      _
    $region39: #{tpu_custom_call.1} parent=1 // pred_check_branch
      %84 = sbr.rel (0) target = $region41
    $region40: #{tpu_custom_call.1} parent=1 // pred_region
      %85 = dma.done [#allocation6], 32
    $region41: #{tpu_custom_call.1} parent=1 // pred_fallthru
      _
    // Predicated region
    $region42: #{tpu_custom_call.1} parent=1 // pred_check
      _
    $region43: #{tpu_custom_call.1} parent=1 // pred_check_branch
      %87 = sbr.rel (0) target = $region45
    $region44: #{tpu_custom_call.1} parent=1 // pred_region
      %88 = dma.done [#allocation6], 1024
    $region45: #{tpu_custom_call.1} parent=1 // pred_fallthru
      _
    // Predicated region
    $region46: #{tpu_custom_call.1} parent=1 // pred_check
      _
    $region47: #{tpu_custom_call.1} parent=1 // pred_check_branch
      %90 = sbr.rel (0) target = $region49
    $region48: #{tpu_custom_call.1} parent=1 // pred_region
      %91 = dma.done [#allocation9], 2048
    $region49: #{tpu_custom_call.1} parent=1 // pred_fallthru
      _
    // Predicated region
    $region50: #{tpu_custom_call.1} parent=1 // pred_check
      _
    $region51: #{tpu_custom_call.1} parent=1 // pred_check_branch
      %93 = sbr.rel (0) target = $region53
    $region52: #{tpu_custom_call.1} parent=1 // pred_region
      %94 = dma.done [#allocation9], 512
    $region53: #{tpu_custom_call.1} parent=1 // pred_fallthru
      _
    %v95 = vld [vmem:[#allocation2] sm:$0x3]
    %v96 = vld [vmem:[#allocation7] sm:$0xff]
    %v97 = vld [vmem:[#allocation7 + $0x8] sm:$0xff]
    %v98 = vld [vmem:[#allocation7 + $0x10] sm:$0xff]
    %v99 = vld [vmem:[#allocation7 + $0x18] sm:$0xff]
    %v100 = vld [vmem:[#allocation7 + $0x20] sm:$0xff]
    %v101 = vld [vmem:[#allocation7 + $0x28] sm:$0xff]
    %v102 = vld [vmem:[#allocation7 + $0x30] sm:$0xff]
    %v103 = vld [vmem:[#allocation7 + $0x38] sm:$0xff]
    %v104 = vld [vmem:[%s1] sm:$0x3]
    %v105 = vld [vmem:[#allocation8] sm:$0xff]
    %v106 = vld [vmem:[#allocation8 + $0x8] sm:$0xff]
    %v107 = vld [vmem:[#allocation8 + $0x10] sm:$0xff]
    %v108 = vld [vmem:[#allocation8 + $0x18] sm:$0xff]
    %v109 = vld [vmem:[#allocation8 + $0x20] sm:$0xff]
    %v110 = vld [vmem:[#allocation8 + $0x28] sm:$0xff]
    %v111 = vld [vmem:[#allocation8 + $0x30] sm:$0xff]
    %v112 = vld [vmem:[#allocation8 + $0x38] sm:$0xff]
    %v113 = vld [vmem:[#allocation8 + $0x40] sm:$0xff]
    %v114 = vld [vmem:[#allocation8 + $0x48] sm:$0xff]
    %v115 = vld [vmem:[#allocation8 + $0x50] sm:$0xff]
    %v116 = vld [vmem:[#allocation8 + $0x58] sm:$0xff]
    %v117 = vld [vmem:[#allocation8 + $0x60] sm:$0xff]
    %v118 = vld [vmem:[#allocation8 + $0x68] sm:$0xff]
    %v119 = vld [vmem:[#allocation8 + $0x70] sm:$0xff]
    %v120 = vld [vmem:[#allocation8 + $0x78] sm:$0xff]
    %vm121 = vcmask 261120
    %v123 = vsel %vm121, %v104, 0
    %125 = vmatprep.subr.mxu0 %v106
    %126 = vmatpush1.msra.mxu0 %v105
    %127 = vmatprep.subr.mxu0 %v110
    %128 = vmatpush1.msra.mxu0 %v109
    %129 = vmatprep.subr.mxu0 %v114
    %130 = vmatpush1.msra.mxu0 %v113
    %131 = vmatprep.subr.mxu0 %v118
    %132 = vmatpush1.msra.mxu0 %v117
    %133 = vmatprep.subr.mxu0 0.0
    %134 = vmatpush1.msra.mxu0 0.0
    %135 = vmatprep.subr.mxu0 0.0
    %136 = vmatpush1.msra.mxu0 0.0
    %137 = vmatprep.subr.mxu0 0.0
    %138 = vmatpush1.msra.mxu0 0.0
    %139 = vmatprep.subr.mxu0 0.0
    %140 = vmatpush1.msra.mxu0 0.0
    %141 = vmatprep.subr.mxu0 0.0
    %142 = vmatpush1.msra.mxu0 0.0
    %143 = vmatprep.subr.mxu0 0.0
    %144 = vmatpush1.msra.mxu0 0.0
    %145 = vmatprep.subr.mxu0 0.0
    %146 = vmatpush1.msra.mxu0 0.0
    %147 = vmatprep.subr.mxu0 0.0
    %148 = vmatpush1.msra.mxu0 0.0
    %149 = vmatprep.subr.mxu0 0.0
    %150 = vmatpush1.msra.mxu0 0.0
    %151 = vmatprep.subr.mxu0 0.0
    %152 = vmatpush1.msra.mxu0 0.0
    %153 = vmatprep.subr.mxu0 0.0
    %154 = vmatpush1.msra.mxu0 0.0
    %155 = vmatprep.subr.mxu0 0.0
    %156 = vmatpush1.msra.mxu0 0.0
    %157 = vmatprep.subr.mxu0 0.0
    %158 = vmatpush1.msra.mxu0 0.0
    %159 = vmatprep.subr.mxu0 0.0
    %160 = vmatpush1.msra.mxu0 0.0
    %161 = vmatprep.subr.mxu0 0.0
    %162 = vmatpush1.msra.mxu0 0.0
    %163 = vmatprep.subr.mxu0 0.0
    %164 = vmatpush1.msra.mxu0 0.0
    %165 = vmatprep.subr.mxu0 0.0
    %166 = vmatpush1.msra.mxu0 0.0
    %167 = vmatprep.subr.mxu0 0.0
    %168 = vmatpush1.msra.mxu0 0.0
    %169 = vmatprep.subr.mxu0 0.0
    %170 = vmatpush1.msra.mxu0 0.0
    %171 = vmatprep.subr.mxu0 0.0
    %172 = vmatpush1.msra.mxu0 0.0
    %173 = vmatprep.subr.mxu0 0.0
    %174 = vmatpush1.msra.mxu0 0.0
    %175 = vmatprep.subr.mxu0 0.0
    %176 = vmatpush1.msra.mxu0 0.0
    %177 = vmatprep.subr.mxu0 0.0
    %178 = vmatpush1.msra.mxu0 0.0
    %179 = vmatprep.subr.mxu0 0.0
    %180 = vmatpush1.msra.mxu0 0.0
    %181 = vmatprep.subr.mxu0 0.0
    %182 = vmatpush1.msra.mxu0 0.0
    %183 = vmatprep.subr.mxu0 0.0
    %184 = vmatpush1.msra.mxu0 0.0
    %185 = vmatprep.subr.mxu0 0.0
    %186 = vmatpush1.msra.mxu0 0.0
    %187 = vmatprep.subr.mxu0 0.0
    %188 = vmatpush1.msra.mxu0 0.0
    %189 = vmatprep.mubr.f32.mxu0 0.0
    %190 = vmatmul.mubr.f32.gmra.mrb[0].mxu0 %v123
    %v191 = vpop.f32.mrb[0].mxu0
    %v192 = vadd.f32 0.0, %v191
    %v193 = vpop.f32.mrb[0].mxu0
    %v194 = vadd.f32 0.0, %v193
    %195 = vdwg.mxu0
    %196 = vmatprep.subr.mxu0 %v108
    %197 = vmatpush1.msra.mxu0 %v107
    %198 = vmatprep.subr.mxu0 %v112
    %199 = vmatpush1.msra.mxu0 %v111
    %200 = vmatprep.subr.mxu0 %v116
    %201 = vmatpush1.msra.mxu0 %v115
    %202 = vmatprep.subr.mxu0 %v120
    %203 = vmatpush1.msra.mxu0 %v119
    %204 = vmatprep.subr.mxu0 0.0
    %205 = vmatpush1.msra.mxu0 0.0
    %206 = vmatprep.subr.mxu0 0.0
    %207 = vmatpush1.msra.mxu0 0.0
    %208 = vmatprep.subr.mxu0 0.0
    %209 = vmatpush1.msra.mxu0 0.0
    %210 = vmatprep.subr.mxu0 0.0
    %211 = vmatpush1.msra.mxu0 0.0
    %212 = vmatprep.subr.mxu0 0.0
    %213 = vmatpush1.msra.mxu0 0.0
    %214 = vmatprep.subr.mxu0 0.0
    %215 = vmatpush1.msra.mxu0 0.0
    %216 = vmatprep.subr.mxu0 0.0
    %217 = vmatpush1.msra.mxu0 0.0
    %218 = vmatprep.subr.mxu0 0.0
    %219 = vmatpush1.msra.mxu0 0.0
    %220 = vmatprep.subr.mxu0 0.0
    %221 = vmatpush1.msra.mxu0 0.0
    %222 = vmatprep.subr.mxu0 0.0
    %223 = vmatpush1.msra.mxu0 0.0
    %224 = vmatprep.subr.mxu0 0.0
    %225 = vmatpush1.msra.mxu0 0.0
    %226 = vmatprep.subr.mxu0 0.0
    %227 = vmatpush1.msra.mxu0 0.0
    %228 = vmatprep.subr.mxu0 0.0
    %229 = vmatpush1.msra.mxu0 0.0
    %230 = vmatprep.subr.mxu0 0.0
    %231 = vmatpush1.msra.mxu0 0.0
    %232 = vmatprep.subr.mxu0 0.0
    %233 = vmatpush1.msra.mxu0 0.0
    %234 = vmatprep.subr.mxu0 0.0
    %235 = vmatpush1.msra.mxu0 0.0
    %236 = vmatprep.subr.mxu0 0.0
    %237 = vmatpush1.msra.mxu0 0.0
    %238 = vmatprep.subr.mxu0 0.0
    %239 = vmatpush1.msra.mxu0 0.0
    %240 = vmatprep.subr.mxu0 0.0
    %241 = vmatpush1.msra.mxu0 0.0
    %242 = vmatprep.subr.mxu0 0.0
    %243 = vmatpush1.msra.mxu0 0.0
    %244 = vmatprep.subr.mxu0 0.0
    %245 = vmatpush1.msra.mxu0 0.0
    %246 = vmatprep.subr.mxu0 0.0
    %247 = vmatpush1.msra.mxu0 0.0
    %248 = vmatprep.subr.mxu0 0.0
    %249 = vmatpush1.msra.mxu0 0.0
    %250 = vmatprep.subr.mxu0 0.0
    %251 = vmatpush1.msra.mxu0 0.0
    %252 = vmatprep.subr.mxu0 0.0
    %253 = vmatpush1.msra.mxu0 0.0
    %254 = vmatprep.subr.mxu0 0.0
    %255 = vmatpush1.msra.mxu0 0.0
    %256 = vmatprep.subr.mxu0 0.0
    %257 = vmatpush1.msra.mxu0 0.0
    %258 = vmatprep.subr.mxu0 0.0
    %259 = vmatpush1.msra.mxu0 0.0
    %260 = vmatprep.mubr.f32.mxu0 0.0
    %261 = vmatmul.mubr.f32.gmra.mrb[0].mxu0 %v123
    %v262 = vpop.f32.mrb[0].mxu0
    %v263 = vadd.f32 0.0, %v262
    %v264 = vpop.f32.mrb[0].mxu0
    %v265 = vadd.f32 0.0, %v264
    %266 = vdwg.mxu0
    %vm267 = vcmask 130048
    %v269 = vsel %vm267, %v95, 0
    %271 = vmatprep.subr.mxu0 %v97
    %272 = vmatpush1.msra.mxu0 %v96
    %273 = vmatprep.subr.mxu0 %v101
    %274 = vmatpush1.msra.mxu0 %v100
    %275 = vmatprep.subr.mxu0 0.0
    %276 = vmatpush1.msra.mxu0 0.0
    %277 = vmatprep.subr.mxu0 0.0
    %278 = vmatpush1.msra.mxu0 0.0
    %279 = vmatprep.subr.mxu0 0.0
    %280 = vmatpush1.msra.mxu0 0.0
    %281 = vmatprep.subr.mxu0 0.0
    %282 = vmatpush1.msra.mxu0 0.0
    %283 = vmatprep.subr.mxu0 0.0
    %284 = vmatpush1.msra.mxu0 0.0
    %285 = vmatprep.subr.mxu0 0.0
    %286 = vmatpush1.msra.mxu0 0.0
    %287 = vmatprep.subr.mxu0 0.0
    %288 = vmatpush1.msra.mxu0 0.0
    %289 = vmatprep.subr.mxu0 0.0
    %290 = vmatpush1.msra.mxu0 0.0
    %291 = vmatprep.subr.mxu0 0.0
    %292 = vmatpush1.msra.mxu0 0.0
    %293 = vmatprep.subr.mxu0 0.0
    %294 = vmatpush1.msra.mxu0 0.0
    %295 = vmatprep.subr.mxu0 0.0
    %296 = vmatpush1.msra.mxu0 0.0
    %297 = vmatprep.subr.mxu0 0.0
    %298 = vmatpush1.msra.mxu0 0.0
    %299 = vmatprep.subr.mxu0 0.0
    %300 = vmatpush1.msra.mxu0 0.0
    %301 = vmatprep.subr.mxu0 0.0
    %302 = vmatpush1.msra.mxu0 0.0
    %303 = vmatprep.subr.mxu0 0.0
    %304 = vmatpush1.msra.mxu0 0.0
    %305 = vmatprep.subr.mxu0 0.0
    %306 = vmatpush1.msra.mxu0 0.0
    %307 = vmatprep.subr.mxu0 0.0
    %308 = vmatpush1.msra.mxu0 0.0
    %309 = vmatprep.subr.mxu0 0.0
    %310 = vmatpush1.msra.mxu0 0.0
    %311 = vmatprep.subr.mxu0 0.0
    %312 = vmatpush1.msra.mxu0 0.0
    %313 = vmatprep.subr.mxu0 0.0
    %314 = vmatpush1.msra.mxu0 0.0
    %315 = vmatprep.subr.mxu0 0.0
    %316 = vmatpush1.msra.mxu0 0.0
    %317 = vmatprep.subr.mxu0 0.0
    %318 = vmatpush1.msra.mxu0 0.0
    %319 = vmatprep.subr.mxu0 0.0
    %320 = vmatpush1.msra.mxu0 0.0
    %321 = vmatprep.subr.mxu0 0.0
    %322 = vmatpush1.msra.mxu0 0.0
    %323 = vmatprep.subr.mxu0 0.0
    %324 = vmatpush1.msra.mxu0 0.0
    %325 = vmatprep.subr.mxu0 0.0
    %326 = vmatpush1.msra.mxu0 0.0
    %327 = vmatprep.subr.mxu0 0.0
    %328 = vmatpush1.msra.mxu0 0.0
    %329 = vmatprep.subr.mxu0 0.0
    %330 = vmatpush1.msra.mxu0 0.0
    %331 = vmatprep.subr.mxu0 0.0
    %332 = vmatpush1.msra.mxu0 0.0
    %333 = vmatprep.subr.mxu0 0.0
    %334 = vmatpush1.msra.mxu0 0.0
    %335 = vmatprep.mubr.f32.mxu0 0.0
    %336 = vmatmul.mubr.f32.gmra.mrb[0].mxu0 %v269
    %v337 = vpop.f32.mrb[0].mxu0
    %v338 = vadd.f32 %v192, %v337
    %v339 = vpop.f32.mrb[0].mxu0
    %v340 = vadd.f32 %v194, %v339
    %341 = vdwg.mxu0
    %342 = vmatprep.subr.mxu0 %v99
    %343 = vmatpush1.msra.mxu0 %v98
    %344 = vmatprep.subr.mxu0 %v103
    %345 = vmatpush1.msra.mxu0 %v102
    %346 = vmatprep.subr.mxu0 0.0
    %347 = vmatpush1.msra.mxu0 0.0
    %348 = vmatprep.subr.mxu0 0.0
    %349 = vmatpush1.msra.mxu0 0.0
    %350 = vmatprep.subr.mxu0 0.0
    %351 = vmatpush1.msra.mxu0 0.0
    %352 = vmatprep.subr.mxu0 0.0
    %353 = vmatpush1.msra.mxu0 0.0
    %354 = vmatprep.subr.mxu0 0.0
    %355 = vmatpush1.msra.mxu0 0.0
    %356 = vmatprep.subr.mxu0 0.0
    %357 = vmatpush1.msra.mxu0 0.0
    %358 = vmatprep.subr.mxu0 0.0
    %359 = vmatpush1.msra.mxu0 0.0
    %360 = vmatprep.subr.mxu0 0.0
    %361 = vmatpush1.msra.mxu0 0.0
    %362 = vmatprep.subr.mxu0 0.0
    %363 = vmatpush1.msra.mxu0 0.0
    %364 = vmatprep.subr.mxu0 0.0
    %365 = vmatpush1.msra.mxu0 0.0
    %366 = vmatprep.subr.mxu0 0.0
    %367 = vmatpush1.msra.mxu0 0.0
    %368 = vmatprep.subr.mxu0 0.0
    %369 = vmatpush1.msra.mxu0 0.0
    %370 = vmatprep.subr.mxu0 0.0
    %371 = vmatpush1.msra.mxu0 0.0
    %372 = vmatprep.subr.mxu0 0.0
    %373 = vmatpush1.msra.mxu0 0.0
    %374 = vmatprep.subr.mxu0 0.0
    %375 = vmatpush1.msra.mxu0 0.0
    %376 = vmatprep.subr.mxu0 0.0
    %377 = vmatpush1.msra.mxu0 0.0
    %378 = vmatprep.subr.mxu0 0.0
    %379 = vmatpush1.msra.mxu0 0.0
    %380 = vmatprep.subr.mxu0 0.0
    %381 = vmatpush1.msra.mxu0 0.0
    %382 = vmatprep.subr.mxu0 0.0
    %383 = vmatpush1.msra.mxu0 0.0
    %384 = vmatprep.subr.mxu0 0.0
    %385 = vmatpush1.msra.mxu0 0.0
    %386 = vmatprep.subr.mxu0 0.0
    %387 = vmatpush1.msra.mxu0 0.0
    %388 = vmatprep.subr.mxu0 0.0
    %389 = vmatpush1.msra.mxu0 0.0
    %390 = vmatprep.subr.mxu0 0.0
    %391 = vmatpush1.msra.mxu0 0.0
    %392 = vmatprep.subr.mxu0 0.0
    %393 = vmatpush1.msra.mxu0 0.0
    %394 = vmatprep.subr.mxu0 0.0
    %395 = vmatpush1.msra.mxu0 0.0
    %396 = vmatprep.subr.mxu0 0.0
    %397 = vmatpush1.msra.mxu0 0.0
    %398 = vmatprep.subr.mxu0 0.0
    %399 = vmatpush1.msra.mxu0 0.0
    %400 = vmatprep.subr.mxu0 0.0
    %401 = vmatpush1.msra.mxu0 0.0
    %402 = vmatprep.subr.mxu0 0.0
    %403 = vmatpush1.msra.mxu0 0.0
    %404 = vmatprep.subr.mxu0 0.0
    %405 = vmatpush1.msra.mxu0 0.0
    %406 = vmatprep.mubr.f32.mxu0 0.0
    %407 = vmatmul.mubr.f32.gmra.mrb[0].mxu0 %v269
    %v408 = vpop.f32.mrb[0].mxu0
    %v409 = vadd.f32 %v263, %v408
    %v410 = vpop.f32.mrb[0].mxu0
    %v411 = vadd.f32 %v265, %v410
    %412 = vdwg.mxu0
    %v413 = vld [vmem:[#allocation5] sm:$0x3]
    %v414 = vld [vmem:[#allocation10] sm:$0xff]
    %v415 = vld [vmem:[#allocation10 + $0x8] sm:$0xff]
    %v416 = vld [vmem:[#allocation10 + $0x10] sm:$0xff]
    %v417 = vld [vmem:[#allocation10 + $0x18] sm:$0xff]
    %vm418 = vcmask 64512
    %v420 = vsel %vm418, %v413, 0
    %422 = vmatprep.subr.mxu0 %v415
    %423 = vmatpush1.msra.mxu0 %v414
    %424 = vmatprep.subr.mxu0 0.0
    %425 = vmatpush1.msra.mxu0 0.0
    %426 = vmatprep.subr.mxu0 0.0
    %427 = vmatpush1.msra.mxu0 0.0
    %428 = vmatprep.subr.mxu0 0.0
    %429 = vmatpush1.msra.mxu0 0.0
    %430 = vmatprep.subr.mxu0 0.0
    %431 = vmatpush1.msra.mxu0 0.0
    %432 = vmatprep.subr.mxu0 0.0
    %433 = vmatpush1.msra.mxu0 0.0
    %434 = vmatprep.subr.mxu0 0.0
    %435 = vmatpush1.msra.mxu0 0.0
    %436 = vmatprep.subr.mxu0 0.0
    %437 = vmatpush1.msra.mxu0 0.0
    %438 = vmatprep.subr.mxu0 0.0
    %439 = vmatpush1.msra.mxu0 0.0
    %440 = vmatprep.subr.mxu0 0.0
    %441 = vmatpush1.msra.mxu0 0.0
    %442 = vmatprep.subr.mxu0 0.0
    %443 = vmatpush1.msra.mxu0 0.0
    %444 = vmatprep.subr.mxu0 0.0
    %445 = vmatpush1.msra.mxu0 0.0
    %446 = vmatprep.subr.mxu0 0.0
    %447 = vmatpush1.msra.mxu0 0.0
    %448 = vmatprep.subr.mxu0 0.0
    %449 = vmatpush1.msra.mxu0 0.0
    %450 = vmatprep.subr.mxu0 0.0
    %451 = vmatpush1.msra.mxu0 0.0
    %452 = vmatprep.subr.mxu0 0.0
    %453 = vmatpush1.msra.mxu0 0.0
    %454 = vmatprep.subr.mxu0 0.0
    %455 = vmatpush1.msra.mxu0 0.0
    %456 = vmatprep.subr.mxu0 0.0
    %457 = vmatpush1.msra.mxu0 0.0
    %458 = vmatprep.subr.mxu0 0.0
    %459 = vmatpush1.msra.mxu0 0.0
    %460 = vmatprep.subr.mxu0 0.0
    %461 = vmatpush1.msra.mxu0 0.0
    %462 = vmatprep.subr.mxu0 0.0
    %463 = vmatpush1.msra.mxu0 0.0
    %464 = vmatprep.subr.mxu0 0.0
    %465 = vmatpush1.msra.mxu0 0.0
    %466 = vmatprep.subr.mxu0 0.0
    %467 = vmatpush1.msra.mxu0 0.0
    %468 = vmatprep.subr.mxu0 0.0
    %469 = vmatpush1.msra.mxu0 0.0
    %470 = vmatprep.subr.mxu0 0.0
    %471 = vmatpush1.msra.mxu0 0.0
    %472 = vmatprep.subr.mxu0 0.0
    %473 = vmatpush1.msra.mxu0 0.0
    %474 = vmatprep.subr.mxu0 0.0
    %475 = vmatpush1.msra.mxu0 0.0
    %476 = vmatprep.subr.mxu0 0.0
    %477 = vmatpush1.msra.mxu0 0.0
    %478 = vmatprep.subr.mxu0 0.0
    %479 = vmatpush1.msra.mxu0 0.0
    %480 = vmatprep.subr.mxu0 0.0
    %481 = vmatpush1.msra.mxu0 0.0
    %482 = vmatprep.subr.mxu0 0.0
    %483 = vmatpush1.msra.mxu0 0.0
    %484 = vmatprep.subr.mxu0 0.0
    %485 = vmatpush1.msra.mxu0 0.0
    %486 = vmatprep.mubr.f32.mxu0 0.0
    %487 = vmatmul.mubr.f32.gmra.mrb[0].mxu0 %v420
    %v488 = vpop.f32.mrb[0].mxu0
    %v489 = vadd.f32 0.0, %v488
    %v490 = vpop.f32.mrb[0].mxu0
    %v491 = vadd.f32 0.0, %v490
    %492 = vdwg.mxu0
    %493 = vmatprep.subr.mxu0 %v417
    %494 = vmatpush1.msra.mxu0 %v416
    %495 = vmatprep.subr.mxu0 0.0
    %496 = vmatpush1.msra.mxu0 0.0
    %497 = vmatprep.subr.mxu0 0.0
    %498 = vmatpush1.msra.mxu0 0.0
    %499 = vmatprep.subr.mxu0 0.0
    %500 = vmatpush1.msra.mxu0 0.0
    %501 = vmatprep.subr.mxu0 0.0
    %502 = vmatpush1.msra.mxu0 0.0
    %503 = vmatprep.subr.mxu0 0.0
    %504 = vmatpush1.msra.mxu0 0.0
    %505 = vmatprep.subr.mxu0 0.0
    %506 = vmatpush1.msra.mxu0 0.0
    %507 = vmatprep.subr.mxu0 0.0
    %508 = vmatpush1.msra.mxu0 0.0
    %509 = vmatprep.subr.mxu0 0.0
    %510 = vmatpush1.msra.mxu0 0.0
    %511 = vmatprep.subr.mxu0 0.0
    %512 = vmatpush1.msra.mxu0 0.0
    %513 = vmatprep.subr.mxu0 0.0
    %514 = vmatpush1.msra.mxu0 0.0
    %515 = vmatprep.subr.mxu0 0.0
    %516 = vmatpush1.msra.mxu0 0.0
    %517 = vmatprep.subr.mxu0 0.0
    %518 = vmatpush1.msra.mxu0 0.0
    %519 = vmatprep.subr.mxu0 0.0
    %520 = vmatpush1.msra.mxu0 0.0
    %521 = vmatprep.subr.mxu0 0.0
    %522 = vmatpush1.msra.mxu0 0.0
    %523 = vmatprep.subr.mxu0 0.0
    %524 = vmatpush1.msra.mxu0 0.0
    %525 = vmatprep.subr.mxu0 0.0
    %526 = vmatpush1.msra.mxu0 0.0
    %527 = vmatprep.subr.mxu0 0.0
    %528 = vmatpush1.msra.mxu0 0.0
    %529 = vmatprep.subr.mxu0 0.0
    %530 = vmatpush1.msra.mxu0 0.0
    %531 = vmatprep.subr.mxu0 0.0
    %532 = vmatpush1.msra.mxu0 0.0
    %533 = vmatprep.subr.mxu0 0.0
    %534 = vmatpush1.msra.mxu0 0.0
    %535 = vmatprep.subr.mxu0 0.0
    %536 = vmatpush1.msra.mxu0 0.0
    %537 = vmatprep.subr.mxu0 0.0
    %538 = vmatpush1.msra.mxu0 0.0
    %539 = vmatprep.subr.mxu0 0.0
    %540 = vmatpush1.msra.mxu0 0.0
    %541 = vmatprep.subr.mxu0 0.0
    %542 = vmatpush1.msra.mxu0 0.0
    %543 = vmatprep.subr.mxu0 0.0
    %544 = vmatpush1.msra.mxu0 0.0
    %545 = vmatprep.subr.mxu0 0.0
    %546 = vmatpush1.msra.mxu0 0.0
    %547 = vmatprep.subr.mxu0 0.0
    %548 = vmatpush1.msra.mxu0 0.0
    %549 = vmatprep.subr.mxu0 0.0
    %550 = vmatpush1.msra.mxu0 0.0
    %551 = vmatprep.subr.mxu0 0.0
    %552 = vmatpush1.msra.mxu0 0.0
    %553 = vmatprep.subr.mxu0 0.0
    %554 = vmatpush1.msra.mxu0 0.0
    %555 = vmatprep.subr.mxu0 0.0
    %556 = vmatpush1.msra.mxu0 0.0
    %557 = vmatprep.mubr.f32.mxu0 0.0
    %558 = vmatmul.mubr.f32.gmra.mrb[0].mxu0 %v420
    %v559 = vpop.f32.mrb[0].mxu0
    %v560 = vadd.f32 0.0, %v559
    %v561 = vpop.f32.mrb[0].mxu0
    %v562 = vadd.f32 0.0, %v561
    %563 = vdwg.mxu0
    %v564 = vadd.f32 %v338, %v489
    %v565 = vadd.f32 %v340, %v491
    %v566 = vadd.f32 %v409, %v560
    %v567 = vadd.f32 %v411, %v562
    %v568 = vld [vmem:[%s7] sm:$0xf]
    %v570 = vlaneseq
    %v571 = vshrl.u32 %v570, 7
    %v572 = vsub.s32 0, %v571
    %v573 = vrot.slane %v568, %v572
    %v574 = vlaneseq
    %v575 = vshrl.u32 %v574, 7
    %v576 = vsub.s32 1, %v575
    %v577 = vrot.slane %v568, %v576
    %v578 = vlaneseq
    %v579 = vshrl.u32 %v578, 7
    %v580 = vsub.s32 2, %v579
    %v581 = vrot.slane %v568, %v580
    %v582 = vlaneseq
    %v583 = vshrl.u32 %v582, 7
    %v584 = vsub.s32 3, %v583
    %v585 = vrot.slane %v568, %v584
    %v590 = vadd.f32 %v564, %v573
    %v591 = vadd.f32 %v565, %v577
    %v592 = vadd.f32 %v566, %v581
    %v593 = vadd.f32 %v567, %v585
    %v594 = vxor.u32 %v590, 2147483648
    %v595 = vmul.f32 %v594, 1.442695
    %v596 = vpow.pop %v595
    %v597 = vadd.f32 %v596, 1.0
    %v598 = vrcp.pop %v597
    %v599 = vmul.f32 1.0, %v598
    %v600 = vxor.u32 %v591, 2147483648
    %v601 = vmul.f32 %v600, 1.442695
    %v602 = vpow.pop %v601
    %v603 = vadd.f32 %v602, 1.0
    %v604 = vrcp.pop %v603
    %v605 = vmul.f32 1.0, %v604
    %v606 = vxor.u32 %v592, 2147483648
    %v607 = vmul.f32 %v606, 1.442695
    %v608 = vpow.pop %v607
    %v609 = vadd.f32 %v608, 1.0
    %v610 = vrcp.pop %v609
    %v611 = vmul.f32 1.0, %v610
    %v612 = vtanh.pop %v593
    %v613 = vld [vmem:[%s3] sm:$0x3]
    %v614 = vmul.f32 %v611, %v613
    %v615 = vmul.f32 %v599, %v612
    %v616 = vadd.f32 %v614, %v615
    %v617 = vtanh.pop %v616
    %v618 = vmul.f32 %v617, %v605
    %619 = vst [vmem:[#allocation11] sm:$0x3] %v616
    %620 = vst [vmem:[#allocation12] sm:$0x3] %v618
    // Predicated region
    $region54: #{tpu_custom_call.1} parent=1 // pred_check
      _
    $region55: #{tpu_custom_call.1} parent=1 // pred_check_branch
      %622 = sbr.rel (0) target = $region57
    $region56: #{tpu_custom_call.1} parent=1 // pred_region
      %s624 = ssub.s32 32, 32
      %625 = vsyncadd [#allocation4], %s624
      %s627 = sshll.u32 [#allocation11], 4
      %s628 = int_to_ptr.vmem [resolvable:$true] %s627
      %630 = dma.vmem_to_hbm [thread:$0]  %s628, 32, %s8, [#allocation4]
    $region57: #{tpu_custom_call.1} parent=1 // pred_fallthru
      _
    // Predicated region
    $region58: #{tpu_custom_call.1} parent=1 // pred_check
      _
    $region59: #{tpu_custom_call.1} parent=1 // pred_check_branch
      %632 = sbr.rel (0) target = $region61
    $region60: #{tpu_custom_call.1} parent=1 // pred_region
      %s634 = ssub.s32 32, 32
      %635 = vsyncadd [#allocation13], %s634
      %s637 = sshll.u32 [#allocation12], 4
      %s638 = int_to_ptr.vmem [resolvable:$true] %s637
      %640 = dma.vmem_to_hbm [thread:$0]  %s638, 32, %s9, [#allocation13]
    $region61: #{tpu_custom_call.1} parent=1 // pred_fallthru
      _
    // Predicated region
    $region62: #{tpu_custom_call.1} parent=1 // pred_check
      _
    $region63: #{tpu_custom_call.1} parent=1 // pred_check_branch
      %642 = sbr.rel (0) target = $region65
    $region64: #{tpu_custom_call.1} parent=1 // pred_region
      %643 = dma.done [#allocation4], 32
    $region65: #{tpu_custom_call.1} parent=1 // pred_fallthru
      _
    // Predicated region
    $region66: #{tpu_custom_call.1} parent=1 // pred_check
      _
    $region67: #{tpu_custom_call.1} parent=1 // pred_check_branch
      %645 = sbr.rel (0) target = $region69
    $region68: #{tpu_custom_call.1} parent=1 // pred_region
      %646 = dma.done [#allocation13], 32
    $region69: #{tpu_custom_call.1} parent=1 // pred_fallthru
      _
    %647 = vsyncpa [#allocation3], 1
    %648 = vsyncpa [#allocation6], 1
    %649 = vsyncpa [#allocation9], 1
    %650 = vsyncpa [#allocation4], 1
    %651 = vsyncpa [#allocation13], 1

// kernel: tpu_custom_call.1
$region0: #{tpu_custom_call.1}
  #allocation0 [shape = 'u32[]', space=smem, size = 0x4, offset = 0x4, fixed_abs, tag = 'smem constant byte address 0x4 - core index']
  #allocation1 [shape = 'u32[144,128]{1,0:T(1,128)}', space=vmem, size = 0x12000, scoped, tag = 'internal scratch']
  %s0 = inlined_call_operand.hbm [shape: f32[2,16], index: 0, kind: input, shape index: {}]
  %s1 = inlined_call_operand.vmem [shape: f32[2,32], index: 1, kind: input, shape index: {}]
  %s2 = inlined_call_operand.hbm [shape: f32[2,8], index: 2, kind: input, shape index: {}]
  %s3 = inlined_call_operand.vmem [shape: f32[2,128], index: 3, kind: input, shape index: {}]
  %s4 = inlined_call_operand.hbm [shape: f32[16,512], index: 4, kind: input, shape index: {}]
  %s5 = inlined_call_operand.hbm [shape: f32[32,512], index: 5, kind: input, shape index: {}]
  %s6 = inlined_call_operand.hbm [shape: f32[8,512], index: 6, kind: input, shape index: {}]
  %s7 = inlined_call_operand.vmem [shape: f32[1,512], index: 7, kind: input, shape index: {}]
  %s8 = inlined_call_operand.hbm [shape: f32[2,128], index: 8, kind: output, shape index: {0}]
  %s9 = inlined_call_operand.hbm [shape: f32[2,128], index: 9, kind: output, shape index: {1}]
  %10 = xla_tuple %s8, %s9
  %s11 = sld [smem:[#allocation0]]
  $region70: #{tpu_custom_call.1} parent=0
    _
  %s13 = ssub.s32 1, %s11
  %s14 = scalar_select 0, %s13, %s11
  $region1: #{tpu_custom_call.1} parent=0
    #allocation2 [shape = 'u8[1024]{0}', space=vmem, size = 0x400, scoped, tag = 'input window, operand 0, single buffered']
    #allocation3 [shape = 's32[1]{0}', space=sflag, size = 0x4, scoped, tag = 'scoped memory for tpu_custom_call.1']
    #allocation4 [shape = 's32[1]{0}', space=sflag, size = 0x4, scoped, tag = 'scoped memory for tpu_custom_call.1']
    #allocation5 [shape = 'u8[1024]{0}', space=vmem, size = 0x400, scoped, tag = 'input window, operand 2, single buffered']
    #allocation6 [shape = 's32[1]{0}', space=sflag, size = 0x4, scoped, tag = 'scoped memory for tpu_custom_call.1']
    #allocation7 [shape = 'u8[32768]{0}', space=vmem, size = 0x8000, scoped, tag = 'input window, operand 4, single buffered']
    #allocation8 [shape = 'u8[65536]{0}', space=vmem, size = 0x10000, scoped, tag = 'input window, operand 5, single buffered']
    #allocation9 [shape = 's32[1]{0}', space=sflag, size = 0x4, scoped, tag = 'scoped memory for tpu_custom_call.1']
    #allocation10 [shape = 'u8[16384]{0}', space=vmem, size = 0x4000, scoped, tag = 'input window, operand 6, single buffered']
    #allocation11 [shape = 'u8[1024]{0}', space=vmem, size = 0x400, scoped, tag = 'output window, operand 0, single buffered']
    #allocation12 [shape = 'u8[1024]{0}', space=vmem, size = 0x400, scoped, tag = 'output window, operand 1, single buffered']
    #allocation13 [shape = 's32[1]{0}', space=sflag, size = 0x4, scoped, tag = 'scoped memory for tpu_custom_call.1']
    %15 = vsyncpa [#allocation3], 0
    %16 = vsyncpa [#allocation6], 0
    %17 = vsyncpa [#allocation9], 0
    %18 = vsyncpa [#allocation4], 0
    %19 = vsyncpa [#allocation13], 0
    // Predicated region
    $region2: #{tpu_custom_call.1} parent=1 // pred_check
      _
    $region3: #{tpu_custom_call.1} parent=1 // pred_check_branch
      %21 = sbr.rel (0) target = $region5
    $region4: #{tpu_custom_call.1} parent=1 // pred_region
      %s23 = ssub.s32 32, 32
      %24 = vsyncadd [#allocation3], %s23
      %s26 = sshll.u32 [#allocation2], 4
      %s27 = int_to_ptr.vmem [resolvable:$true] %s26
      %29 = dma.hbm_to_vmem [thread:$0]  %s0, 32, %s27, [#allocation3]
    $region5: #{tpu_custom_call.1} parent=1 // pred_fallthru
      _
    // Predicated region
    $region6: #{tpu_custom_call.1} parent=1 // pred_check
      _
    $region7: #{tpu_custom_call.1} parent=1 // pred_check_branch
      %31 = sbr.rel (0) target = $region9
    $region8: #{tpu_custom_call.1} parent=1 // pred_region
      _
    $region9: #{tpu_custom_call.1} parent=1 // pred_fallthru
      _
    // Predicated region
    $region10: #{tpu_custom_call.1} parent=1 // pred_check
      _
    $region11: #{tpu_custom_call.1} parent=1 // pred_check_branch
      %33 = sbr.rel (0) target = $region13
    $region12: #{tpu_custom_call.1} parent=1 // pred_region
      %s35 = ssub.s32 32, 32
      %36 = vsyncadd [#allocation6], %s35
      %s38 = sshll.u32 [#allocation5], 4
      %s39 = int_to_ptr.vmem [resolvable:$true] %s38
      %41 = dma.hbm_to_vmem [thread:$0]  %s2, 32, %s39, [#allocation6]
    $region13: #{tpu_custom_call.1} parent=1 // pred_fallthru
      _
    // Predicated region
    $region14: #{tpu_custom_call.1} parent=1 // pred_check
      _
    $region15: #{tpu_custom_call.1} parent=1 // pred_check_branch
      %43 = sbr.rel (0) target = $region17
    $region16: #{tpu_custom_call.1} parent=1 // pred_region
      _
    $region17: #{tpu_custom_call.1} parent=1 // pred_fallthru
      _
    // Predicated region
    $region18: #{tpu_custom_call.1} parent=1 // pred_check
      _
    $region19: #{tpu_custom_call.1} parent=1 // pred_check_branch
      %45 = sbr.rel (0) target = $region21
    $region20: #{tpu_custom_call.1} parent=1 // pred_region
      %s47 = ssub.s32 1024, 1024
      %48 = vsyncadd [#allocation6], %s47
      %s49 = sshll.u32 [#allocation7], 4
      %s50 = int_to_ptr.vmem [resolvable:$true] %s49
      %55 = dma.hbm_to_vmem [thread:$0]  %s4, 1024, %s50, [#allocation6], 512, 512, 32
    $region21: #{tpu_custom_call.1} parent=1 // pred_fallthru
      _
    // Predicated region
    $region22: #{tpu_custom_call.1} parent=1 // pred_check
      _
    $region23: #{tpu_custom_call.1} parent=1 // pred_check_branch
      %57 = sbr.rel (0) target = $region25
    $region24: #{tpu_custom_call.1} parent=1 // pred_region
      %s59 = ssub.s32 2048, 2048
      %60 = vsyncadd [#allocation9], %s59
      %s61 = sshll.u32 [#allocation8], 4
      %s62 = int_to_ptr.vmem [resolvable:$true] %s61
      %67 = dma.hbm_to_vmem [thread:$0]  %s5, 2048, %s62, [#allocation9], 512, 512, 32
    $region25: #{tpu_custom_call.1} parent=1 // pred_fallthru
      _
    // Predicated region
    $region26: #{tpu_custom_call.1} parent=1 // pred_check
      _
    $region27: #{tpu_custom_call.1} parent=1 // pred_check_branch
      %69 = sbr.rel (0) target = $region29
    $region28: #{tpu_custom_call.1} parent=1 // pred_region
      %s71 = ssub.s32 512, 512
      %72 = vsyncadd [#allocation9], %s71
      %s74 = sshll.u32 [#allocation10], 4
      %s75 = int_to_ptr.vmem [resolvable:$true] %s74
      %77 = dma.hbm_to_vmem [thread:$0]  %s6, 512, %s75, [#allocation9]
    $region29: #{tpu_custom_call.1} parent=1 // pred_fallthru
      _
    // Predicated region
    $region30: #{tpu_custom_call.1} parent=1 // pred_check
      _
    $region31: #{tpu_custom_call.1} parent=1 // pred_check_branch
      %79 = sbr.rel (0) target = $region33
    $region32: #{tpu_custom_call.1} parent=1 // pred_region
      _
    $region33: #{tpu_custom_call.1} parent=1 // pred_fallthru
      _
    // Predicated region
    $region34: #{tpu_custom_call.1} parent=1 // pred_check
      _
    $region35: #{tpu_custom_call.1} parent=1 // pred_check_branch
      %81 = sbr.rel (0) target = $region37
    $region36: #{tpu_custom_call.1} parent=1 // pred_region
      %82 = dma.done [#allocation3], 32
    $region37: #{tpu_custom_call.1} parent=1 // pred_fallthru
      _
    // Predicated region
    $region38: #{tpu_custom_call.1} parent=1 // pred_check
      _
    $region39: #{tpu_custom_call.1} parent=1 // pred_check_branch
      %84 = sbr.rel (0) target = $region41
    $region40: #{tpu_custom_call.1} parent=1 // pred_region
      %85 = dma.done [#allocation6], 32
    $region41: #{tpu_custom_call.1} parent=1 // pred_fallthru
      _
    // Predicated region
    $region42: #{tpu_custom_call.1} parent=1 // pred_check
      _
    $region43: #{tpu_custom_call.1} parent=1 // pred_check_branch
      %87 = sbr.rel (0) target = $region45
    $region44: #{tpu_custom_call.1} parent=1 // pred_region
      %88 = dma.done [#allocation6], 1024
    $region45: #{tpu_custom_call.1} parent=1 // pred_fallthru
      _
    // Predicated region
    $region46: #{tpu_custom_call.1} parent=1 // pred_check
      _
    $region47: #{tpu_custom_call.1} parent=1 // pred_check_branch
      %90 = sbr.rel (0) target = $region49
    $region48: #{tpu_custom_call.1} parent=1 // pred_region
      %91 = dma.done [#allocation9], 2048
    $region49: #{tpu_custom_call.1} parent=1 // pred_fallthru
      _
    // Predicated region
    $region50: #{tpu_custom_call.1} parent=1 // pred_check
      _
    $region51: #{tpu_custom_call.1} parent=1 // pred_check_branch
      %93 = sbr.rel (0) target = $region53
    $region52: #{tpu_custom_call.1} parent=1 // pred_region
      %94 = dma.done [#allocation9], 512
    $region53: #{tpu_custom_call.1} parent=1 // pred_fallthru
      _
    %v95 = vld [vmem:[#allocation2] sm:$0x3]
    %v96 = vld [vmem:[#allocation7] sm:$0xff]
    %v97 = vld [vmem:[#allocation7 + $0x8] sm:$0xff]
    %v98 = vld [vmem:[#allocation7 + $0x10] sm:$0xff]
    %v99 = vld [vmem:[#allocation7 + $0x18] sm:$0xff]
    %v100 = vld [vmem:[#allocation7 + $0x20] sm:$0xff]
    %v101 = vld [vmem:[#allocation7 + $0x28] sm:$0xff]
    %v102 = vld [vmem:[#allocation7 + $0x30] sm:$0xff]
    %v103 = vld [vmem:[#allocation7 + $0x38] sm:$0xff]
    %v104 = vld [vmem:[%s1] sm:$0x3]
    %v105 = vld [vmem:[#allocation8] sm:$0xff]
    %v106 = vld [vmem:[#allocation8 + $0x8] sm:$0xff]
    %v107 = vld [vmem:[#allocation8 + $0x10] sm:$0xff]
    %v108 = vld [vmem:[#allocation8 + $0x18] sm:$0xff]
    %v109 = vld [vmem:[#allocation8 + $0x20] sm:$0xff]
    %v110 = vld [vmem:[#allocation8 + $0x28] sm:$0xff]
    %v111 = vld [vmem:[#allocation8 + $0x30] sm:$0xff]
    %v112 = vld [vmem:[#allocation8 + $0x38] sm:$0xff]
    %v113 = vld [vmem:[#allocation8 + $0x40] sm:$0xff]
    %v114 = vld [vmem:[#allocation8 + $0x48] sm:$0xff]
    %v115 = vld [vmem:[#allocation8 + $0x50] sm:$0xff]
    %v116 = vld [vmem:[#allocation8 + $0x58] sm:$0xff]
    %v117 = vld [vmem:[#allocation8 + $0x60] sm:$0xff]
    %v118 = vld [vmem:[#allocation8 + $0x68] sm:$0xff]
    %v119 = vld [vmem:[#allocation8 + $0x70] sm:$0xff]
    %v120 = vld [vmem:[#allocation8 + $0x78] sm:$0xff]
    %vm121 = vcmask 261120
    %v123 = vsel %vm121, %v104, 0
    %125 = vmatprep.subr.mxu0 %v106
    %126 = vmatpush1.msra.mxu0 %v105
    %127 = vmatprep.subr.mxu0 %v110
    %128 = vmatpush1.msra.mxu0 %v109
    %129 = vmatprep.subr.mxu0 %v114
    %130 = vmatpush1.msra.mxu0 %v113
    %131 = vmatprep.subr.mxu0 %v118
    %132 = vmatpush1.msra.mxu0 %v117
    %133 = vmatprep.subr.mxu0 0.0
    %134 = vmatpush1.msra.mxu0 0.0
    %135 = vmatprep.subr.mxu0 0.0
    %136 = vmatpush1.msra.mxu0 0.0
    %137 = vmatprep.subr.mxu0 0.0
    %138 = vmatpush1.msra.mxu0 0.0
    %139 = vmatprep.subr.mxu0 0.0
    %140 = vmatpush1.msra.mxu0 0.0
    %141 = vmatprep.subr.mxu0 0.0
    %142 = vmatpush1.msra.mxu0 0.0
    %143 = vmatprep.subr.mxu0 0.0
    %144 = vmatpush1.msra.mxu0 0.0
    %145 = vmatprep.subr.mxu0 0.0
    %146 = vmatpush1.msra.mxu0 0.0
    %147 = vmatprep.subr.mxu0 0.0
    %148 = vmatpush1.msra.mxu0 0.0
    %149 = vmatprep.subr.mxu0 0.0
    %150 = vmatpush1.msra.mxu0 0.0
    %151 = vmatprep.subr.mxu0 0.0
    %152 = vmatpush1.msra.mxu0 0.0
    %153 = vmatprep.subr.mxu0 0.0
    %154 = vmatpush1.msra.mxu0 0.0
    %155 = vmatprep.subr.mxu0 0.0
    %156 = vmatpush1.msra.mxu0 0.0
    %157 = vmatprep.subr.mxu0 0.0
    %158 = vmatpush1.msra.mxu0 0.0
    %159 = vmatprep.subr.mxu0 0.0
    %160 = vmatpush1.msra.mxu0 0.0
    %161 = vmatprep.subr.mxu0 0.0
    %162 = vmatpush1.msra.mxu0 0.0
    %163 = vmatprep.subr.mxu0 0.0
    %164 = vmatpush1.msra.mxu0 0.0
    %165 = vmatprep.subr.mxu0 0.0
    %166 = vmatpush1.msra.mxu0 0.0
    %167 = vmatprep.subr.mxu0 0.0
    %168 = vmatpush1.msra.mxu0 0.0
    %169 = vmatprep.subr.mxu0 0.0
    %170 = vmatpush1.msra.mxu0 0.0
    %171 = vmatprep.subr.mxu0 0.0
    %172 = vmatpush1.msra.mxu0 0.0
    %173 = vmatprep.subr.mxu0 0.0
    %174 = vmatpush1.msra.mxu0 0.0
    %175 = vmatprep.subr.mxu0 0.0
    %176 = vmatpush1.msra.mxu0 0.0
    %177 = vmatprep.subr.mxu0 0.0
    %178 = vmatpush1.msra.mxu0 0.0
    %179 = vmatprep.subr.mxu0 0.0
    %180 = vmatpush1.msra.mxu0 0.0
    %181 = vmatprep.subr.mxu0 0.0
    %182 = vmatpush1.msra.mxu0 0.0
    %183 = vmatprep.subr.mxu0 0.0
    %184 = vmatpush1.msra.mxu0 0.0
    %185 = vmatprep.subr.mxu0 0.0
    %186 = vmatpush1.msra.mxu0 0.0
    %187 = vmatprep.subr.mxu0 0.0
    %188 = vmatpush1.msra.mxu0 0.0
    %189 = vmatprep.mubr.f32.mxu0 0.0
    %190 = vmatmul.mubr.f32.gmra.mrb[0].mxu0 %v123
    %v191 = vpop.f32.mrb[0].mxu0
    %v192 = vadd.f32 0.0, %v191
    %v193 = vpop.f32.mrb[0].mxu0
    %v194 = vadd.f32 0.0, %v193
    %195 = vdwg.mxu0
    %196 = vmatprep.subr.mxu0 %v108
    %197 = vmatpush1.msra.mxu0 %v107
    %198 = vmatprep.subr.mxu0 %v112
    %199 = vmatpush1.msra.mxu0 %v111
    %200 = vmatprep.subr.mxu0 %v116
    %201 = vmatpush1.msra.mxu0 %v115
    %202 = vmatprep.subr.mxu0 %v120
    %203 = vmatpush1.msra.mxu0 %v119
    %204 = vmatprep.subr.mxu0 0.0
    %205 = vmatpush1.msra.mxu0 0.0
    %206 = vmatprep.subr.mxu0 0.0
    %207 = vmatpush1.msra.mxu0 0.0
    %208 = vmatprep.subr.mxu0 0.0
    %209 = vmatpush1.msra.mxu0 0.0
    %210 = vmatprep.subr.mxu0 0.0
    %211 = vmatpush1.msra.mxu0 0.0
    %212 = vmatprep.subr.mxu0 0.0
    %213 = vmatpush1.msra.mxu0 0.0
    %214 = vmatprep.subr.mxu0 0.0
    %215 = vmatpush1.msra.mxu0 0.0
    %216 = vmatprep.subr.mxu0 0.0
    %217 = vmatpush1.msra.mxu0 0.0
    %218 = vmatprep.subr.mxu0 0.0
    %219 = vmatpush1.msra.mxu0 0.0
    %220 = vmatprep.subr.mxu0 0.0
    %221 = vmatpush1.msra.mxu0 0.0
    %222 = vmatprep.subr.mxu0 0.0
    %223 = vmatpush1.msra.mxu0 0.0
    %224 = vmatprep.subr.mxu0 0.0
    %225 = vmatpush1.msra.mxu0 0.0
    %226 = vmatprep.subr.mxu0 0.0
    %227 = vmatpush1.msra.mxu0 0.0
    %228 = vmatprep.subr.mxu0 0.0
    %229 = vmatpush1.msra.mxu0 0.0
    %230 = vmatprep.subr.mxu0 0.0
    %231 = vmatpush1.msra.mxu0 0.0
    %232 = vmatprep.subr.mxu0 0.0
    %233 = vmatpush1.msra.mxu0 0.0
    %234 = vmatprep.subr.mxu0 0.0
    %235 = vmatpush1.msra.mxu0 0.0
    %236 = vmatprep.subr.mxu0 0.0
    %237 = vmatpush1.msra.mxu0 0.0
    %238 = vmatprep.subr.mxu0 0.0
    %239 = vmatpush1.msra.mxu0 0.0
    %240 = vmatprep.subr.mxu0 0.0
    %241 = vmatpush1.msra.mxu0 0.0
    %242 = vmatprep.subr.mxu0 0.0
    %243 = vmatpush1.msra.mxu0 0.0
    %244 = vmatprep.subr.mxu0 0.0
    %245 = vmatpush1.msra.mxu0 0.0
    %246 = vmatprep.subr.mxu0 0.0
    %247 = vmatpush1.msra.mxu0 0.0
    %248 = vmatprep.subr.mxu0 0.0
    %249 = vmatpush1.msra.mxu0 0.0
    %250 = vmatprep.subr.mxu0 0.0
    %251 = vmatpush1.msra.mxu0 0.0
    %252 = vmatprep.subr.mxu0 0.0
    %253 = vmatpush1.msra.mxu0 0.0
    %254 = vmatprep.subr.mxu0 0.0
    %255 = vmatpush1.msra.mxu0 0.0
    %256 = vmatprep.subr.mxu0 0.0
    %257 = vmatpush1.msra.mxu0 0.0
    %258 = vmatprep.subr.mxu0 0.0
    %259 = vmatpush1.msra.mxu0 0.0
    %260 = vmatprep.mubr.f32.mxu0 0.0
    %261 = vmatmul.mubr.f32.gmra.mrb[0].mxu0 %v123
    %v262 = vpop.f32.mrb[0].mxu0
    %v263 = vadd.f32 0.0, %v262
    %v264 = vpop.f32.mrb[0].mxu0
    %v265 = vadd.f32 0.0, %v264
    %266 = vdwg.mxu0
    %vm267 = vcmask 130048
    %v269 = vsel %vm267, %v95, 0
    %271 = vmatprep.subr.mxu0 %v97
    %272 = vmatpush1.msra.mxu0 %v96
    %273 = vmatprep.subr.mxu0 %v101
    %274 = vmatpush1.msra.mxu0 %v100
    %275 = vmatprep.subr.mxu0 0.0
    %276 = vmatpush1.msra.mxu0 0.0
    %277 = vmatprep.subr.mxu0 0.0
    %278 = vmatpush1.msra.mxu0 0.0
    %279 = vmatprep.subr.mxu0 0.0
    %280 = vmatpush1.msra.mxu0 0.0
    %281 = vmatprep.subr.mxu0 0.0
    %282 = vmatpush1.msra.mxu0 0.0
    %283 = vmatprep.subr.mxu0 0.0
    %284 = vmatpush1.msra.mxu0 0.0
    %285 = vmatprep.subr.mxu0 0.0
    %286 = vmatpush1.msra.mxu0 0.0
    %287 = vmatprep.subr.mxu0 0.0
    %288 = vmatpush1.msra.mxu0 0.0
    %289 = vmatprep.subr.mxu0 0.0
    %290 = vmatpush1.msra.mxu0 0.0
    %291 = vmatprep.subr.mxu0 0.0
    %292 = vmatpush1.msra.mxu0 0.0
    %293 = vmatprep.subr.mxu0 0.0
    %294 = vmatpush1.msra.mxu0 0.0
    %295 = vmatprep.subr.mxu0 0.0
    %296 = vmatpush1.msra.mxu0 0.0
    %297 = vmatprep.subr.mxu0 0.0
    %298 = vmatpush1.msra.mxu0 0.0
    %299 = vmatprep.subr.mxu0 0.0
    %300 = vmatpush1.msra.mxu0 0.0
    %301 = vmatprep.subr.mxu0 0.0
    %302 = vmatpush1.msra.mxu0 0.0
    %303 = vmatprep.subr.mxu0 0.0
    %304 = vmatpush1.msra.mxu0 0.0
    %305 = vmatprep.subr.mxu0 0.0
    %306 = vmatpush1.msra.mxu0 0.0
    %307 = vmatprep.subr.mxu0 0.0
    %308 = vmatpush1.msra.mxu0 0.0
    %309 = vmatprep.subr.mxu0 0.0
    %310 = vmatpush1.msra.mxu0 0.0
    %311 = vmatprep.subr.mxu0 0.0
    %312 = vmatpush1.msra.mxu0 0.0
    %313 = vmatprep.subr.mxu0 0.0
    %314 = vmatpush1.msra.mxu0 0.0
    %315 = vmatprep.subr.mxu0 0.0
    %316 = vmatpush1.msra.mxu0 0.0
    %317 = vmatprep.subr.mxu0 0.0
    %318 = vmatpush1.msra.mxu0 0.0
    %319 = vmatprep.subr.mxu0 0.0
    %320 = vmatpush1.msra.mxu0 0.0
    %321 = vmatprep.subr.mxu0 0.0
    %322 = vmatpush1.msra.mxu0 0.0
    %323 = vmatprep.subr.mxu0 0.0
    %324 = vmatpush1.msra.mxu0 0.0
    %325 = vmatprep.subr.mxu0 0.0
    %326 = vmatpush1.msra.mxu0 0.0
    %327 = vmatprep.subr.mxu0 0.0
    %328 = vmatpush1.msra.mxu0 0.0
    %329 = vmatprep.subr.mxu0 0.0
    %330 = vmatpush1.msra.mxu0 0.0
    %331 = vmatprep.subr.mxu0 0.0
    %332 = vmatpush1.msra.mxu0 0.0
    %333 = vmatprep.subr.mxu0 0.0
    %334 = vmatpush1.msra.mxu0 0.0
    %335 = vmatprep.mubr.f32.mxu0 0.0
    %336 = vmatmul.mubr.f32.gmra.mrb[0].mxu0 %v269
    %v337 = vpop.f32.mrb[0].mxu0
    %v338 = vadd.f32 %v192, %v337
    %v339 = vpop.f32.mrb[0].mxu0
    %v340 = vadd.f32 %v194, %v339
    %341 = vdwg.mxu0
    %342 = vmatprep.subr.mxu0 %v99
    %343 = vmatpush1.msra.mxu0 %v98
    %344 = vmatprep.subr.mxu0 %v103
    %345 = vmatpush1.msra.mxu0 %v102
    %346 = vmatprep.subr.mxu0 0.0
    %347 = vmatpush1.msra.mxu0 0.0
    %348 = vmatprep.subr.mxu0 0.0
    %349 = vmatpush1.msra.mxu0 0.0
    %350 = vmatprep.subr.mxu0 0.0
    %351 = vmatpush1.msra.mxu0 0.0
    %352 = vmatprep.subr.mxu0 0.0
    %353 = vmatpush1.msra.mxu0 0.0
    %354 = vmatprep.subr.mxu0 0.0
    %355 = vmatpush1.msra.mxu0 0.0
    %356 = vmatprep.subr.mxu0 0.0
    %357 = vmatpush1.msra.mxu0 0.0
    %358 = vmatprep.subr.mxu0 0.0
    %359 = vmatpush1.msra.mxu0 0.0
    %360 = vmatprep.subr.mxu0 0.0
    %361 = vmatpush1.msra.mxu0 0.0
    %362 = vmatprep.subr.mxu0 0.0
    %363 = vmatpush1.msra.mxu0 0.0
    %364 = vmatprep.subr.mxu0 0.0
    %365 = vmatpush1.msra.mxu0 0.0
    %366 = vmatprep.subr.mxu0 0.0
    %367 = vmatpush1.msra.mxu0 0.0
    %368 = vmatprep.subr.mxu0 0.0
    %369 = vmatpush1.msra.mxu0 0.0
    %370 = vmatprep.subr.mxu0 0.0
    %371 = vmatpush1.msra.mxu0 0.0
    %372 = vmatprep.subr.mxu0 0.0
    %373 = vmatpush1.msra.mxu0 0.0
    %374 = vmatprep.subr.mxu0 0.0
    %375 = vmatpush1.msra.mxu0 0.0
    %376 = vmatprep.subr.mxu0 0.0
    %377 = vmatpush1.msra.mxu0 0.0
    %378 = vmatprep.subr.mxu0 0.0
    %379 = vmatpush1.msra.mxu0 0.0
    %380 = vmatprep.subr.mxu0 0.0
    %381 = vmatpush1.msra.mxu0 0.0
    %382 = vmatprep.subr.mxu0 0.0
    %383 = vmatpush1.msra.mxu0 0.0
    %384 = vmatprep.subr.mxu0 0.0
    %385 = vmatpush1.msra.mxu0 0.0
    %386 = vmatprep.subr.mxu0 0.0
    %387 = vmatpush1.msra.mxu0 0.0
    %388 = vmatprep.subr.mxu0 0.0
    %389 = vmatpush1.msra.mxu0 0.0
    %390 = vmatprep.subr.mxu0 0.0
    %391 = vmatpush1.msra.mxu0 0.0
    %392 = vmatprep.subr.mxu0 0.0
    %393 = vmatpush1.msra.mxu0 0.0
    %394 = vmatprep.subr.mxu0 0.0
    %395 = vmatpush1.msra.mxu0 0.0
    %396 = vmatprep.subr.mxu0 0.0
    %397 = vmatpush1.msra.mxu0 0.0
    %398 = vmatprep.subr.mxu0 0.0
    %399 = vmatpush1.msra.mxu0 0.0
    %400 = vmatprep.subr.mxu0 0.0
    %401 = vmatpush1.msra.mxu0 0.0
    %402 = vmatprep.subr.mxu0 0.0
    %403 = vmatpush1.msra.mxu0 0.0
    %404 = vmatprep.subr.mxu0 0.0
    %405 = vmatpush1.msra.mxu0 0.0
    %406 = vmatprep.mubr.f32.mxu0 0.0
    %407 = vmatmul.mubr.f32.gmra.mrb[0].mxu0 %v269
    %v408 = vpop.f32.mrb[0].mxu0
    %v409 = vadd.f32 %v263, %v408
    %v410 = vpop.f32.mrb[0].mxu0
    %v411 = vadd.f32 %v265, %v410
    %412 = vdwg.mxu0
    %v413 = vld [vmem:[#allocation5] sm:$0x3]
    %v414 = vld [vmem:[#allocation10] sm:$0xff]
    %v415 = vld [vmem:[#allocation10 + $0x8] sm:$0xff]
    %v416 = vld [vmem:[#allocation10 + $0x10] sm:$0xff]
    %v417 = vld [vmem:[#allocation10 + $0x18] sm:$0xff]
    %vm418 = vcmask 64512
    %v420 = vsel %vm418, %v413, 0
    %422 = vmatprep.subr.mxu0 %v415
    %423 = vmatpush1.msra.mxu0 %v414
    %424 = vmatprep.subr.mxu0 0.0
    %425 = vmatpush1.msra.mxu0 0.0
    %426 = vmatprep.subr.mxu0 0.0
    %427 = vmatpush1.msra.mxu0 0.0
    %428 = vmatprep.subr.mxu0 0.0
    %429 = vmatpush1.msra.mxu0 0.0
    %430 = vmatprep.subr.mxu0 0.0
    %431 = vmatpush1.msra.mxu0 0.0
    %432 = vmatprep.subr.mxu0 0.0
    %433 = vmatpush1.msra.mxu0 0.0
    %434 = vmatprep.subr.mxu0 0.0
    %435 = vmatpush1.msra.mxu0 0.0
    %436 = vmatprep.subr.mxu0 0.0
    %437 = vmatpush1.msra.mxu0 0.0
    %438 = vmatprep.subr.mxu0 0.0
    %439 = vmatpush1.msra.mxu0 0.0
    %440 = vmatprep.subr.mxu0 0.0
    %441 = vmatpush1.msra.mxu0 0.0
    %442 = vmatprep.subr.mxu0 0.0
    %443 = vmatpush1.msra.mxu0 0.0
    %444 = vmatprep.subr.mxu0 0.0
    %445 = vmatpush1.msra.mxu0 0.0
    %446 = vmatprep.subr.mxu0 0.0
    %447 = vmatpush1.msra.mxu0 0.0
    %448 = vmatprep.subr.mxu0 0.0
    %449 = vmatpush1.msra.mxu0 0.0
    %450 = vmatprep.subr.mxu0 0.0
    %451 = vmatpush1.msra.mxu0 0.0
    %452 = vmatprep.subr.mxu0 0.0
    %453 = vmatpush1.msra.mxu0 0.0
    %454 = vmatprep.subr.mxu0 0.0
    %455 = vmatpush1.msra.mxu0 0.0
    %456 = vmatprep.subr.mxu0 0.0
    %457 = vmatpush1.msra.mxu0 0.0
    %458 = vmatprep.subr.mxu0 0.0
    %459 = vmatpush1.msra.mxu0 0.0
    %460 = vmatprep.subr.mxu0 0.0
    %461 = vmatpush1.msra.mxu0 0.0
    %462 = vmatprep.subr.mxu0 0.0
    %463 = vmatpush1.msra.mxu0 0.0
    %464 = vmatprep.subr.mxu0 0.0
    %465 = vmatpush1.msra.mxu0 0.0
    %466 = vmatprep.subr.mxu0 0.0
    %467 = vmatpush1.msra.mxu0 0.0
    %468 = vmatprep.subr.mxu0 0.0
    %469 = vmatpush1.msra.mxu0 0.0
    %470 = vmatprep.subr.mxu0 0.0
    %471 = vmatpush1.msra.mxu0 0.0
    %472 = vmatprep.subr.mxu0 0.0
    %473 = vmatpush1.msra.mxu0 0.0
    %474 = vmatprep.subr.mxu0 0.0
    %475 = vmatpush1.msra.mxu0 0.0
    %476 = vmatprep.subr.mxu0 0.0
    %477 = vmatpush1.msra.mxu0 0.0
    %478 = vmatprep.subr.mxu0 0.0
    %479 = vmatpush1.msra.mxu0 0.0
    %480 = vmatprep.subr.mxu0 0.0
    %481 = vmatpush1.msra.mxu0 0.0
    %482 = vmatprep.subr.mxu0 0.0
    %483 = vmatpush1.msra.mxu0 0.0
    %484 = vmatprep.subr.mxu0 0.0
    %485 = vmatpush1.msra.mxu0 0.0
    %486 = vmatprep.mubr.f32.mxu0 0.0
    %487 = vmatmul.mubr.f32.gmra.mrb[0].mxu0 %v420
    %v488 = vpop.f32.mrb[0].mxu0
    %v489 = vadd.f32 0.0, %v488
    %v490 = vpop.f32.mrb[0].mxu0
    %v491 = vadd.f32 0.0, %v490
    %492 = vdwg.mxu0
    %493 = vmatprep.subr.mxu0 %v417
    %494 = vmatpush1.msra.mxu0 %v416
    %495 = vmatprep.subr.mxu0 0.0
    %496 = vmatpush1.msra.mxu0 0.0
    %497 = vmatprep.subr.mxu0 0.0
    %498 = vmatpush1.msra.mxu0 0.0
    %499 = vmatprep.subr.mxu0 0.0
    %500 = vmatpush1.msra.mxu0 0.0
    %501 = vmatprep.subr.mxu0 0.0
    %502 = vmatpush1.msra.mxu0 0.0
    %503 = vmatprep.subr.mxu0 0.0
    %504 = vmatpush1.msra.mxu0 0.0
    %505 = vmatprep.subr.mxu0 0.0
    %506 = vmatpush1.msra.mxu0 0.0
    %507 = vmatprep.subr.mxu0 0.0
    %508 = vmatpush1.msra.mxu0 0.0
    %509 = vmatprep.subr.mxu0 0.0
    %510 = vmatpush1.msra.mxu0 0.0
    %511 = vmatprep.subr.mxu0 0.0
    %512 = vmatpush1.msra.mxu0 0.0
    %513 = vmatprep.subr.mxu0 0.0
    %514 = vmatpush1.msra.mxu0 0.0
    %515 = vmatprep.subr.mxu0 0.0
    %516 = vmatpush1.msra.mxu0 0.0
    %517 = vmatprep.subr.mxu0 0.0
    %518 = vmatpush1.msra.mxu0 0.0
    %519 = vmatprep.subr.mxu0 0.0
    %520 = vmatpush1.msra.mxu0 0.0
    %521 = vmatprep.subr.mxu0 0.0
    %522 = vmatpush1.msra.mxu0 0.0
    %523 = vmatprep.subr.mxu0 0.0
    %524 = vmatpush1.msra.mxu0 0.0
    %525 = vmatprep.subr.mxu0 0.0
    %526 = vmatpush1.msra.mxu0 0.0
    %527 = vmatprep.subr.mxu0 0.0
    %528 = vmatpush1.msra.mxu0 0.0
    %529 = vmatprep.subr.mxu0 0.0
    %530 = vmatpush1.msra.mxu0 0.0
    %531 = vmatprep.subr.mxu0 0.0
    %532 = vmatpush1.msra.mxu0 0.0
    %533 = vmatprep.subr.mxu0 0.0
    %534 = vmatpush1.msra.mxu0 0.0
    %535 = vmatprep.subr.mxu0 0.0
    %536 = vmatpush1.msra.mxu0 0.0
    %537 = vmatprep.subr.mxu0 0.0
    %538 = vmatpush1.msra.mxu0 0.0
    %539 = vmatprep.subr.mxu0 0.0
    %540 = vmatpush1.msra.mxu0 0.0
    %541 = vmatprep.subr.mxu0 0.0
    %542 = vmatpush1.msra.mxu0 0.0
    %543 = vmatprep.subr.mxu0 0.0
    %544 = vmatpush1.msra.mxu0 0.0
    %545 = vmatprep.subr.mxu0 0.0
    %546 = vmatpush1.msra.mxu0 0.0
    %547 = vmatprep.subr.mxu0 0.0
    %548 = vmatpush1.msra.mxu0 0.0
    %549 = vmatprep.subr.mxu0 0.0
    %550 = vmatpush1.msra.mxu0 0.0
    %551 = vmatprep.subr.mxu0 0.0
    %552 = vmatpush1.msra.mxu0 0.0
    %553 = vmatprep.subr.mxu0 0.0
    %554 = vmatpush1.msra.mxu0 0.0
    %555 = vmatprep.subr.mxu0 0.0
    %556 = vmatpush1.msra.mxu0 0.0
    %557 = vmatprep.mubr.f32.mxu0 0.0
    %558 = vmatmul.mubr.f32.gmra.mrb[0].mxu0 %v420
    %v559 = vpop.f32.mrb[0].mxu0
    %v560 = vadd.f32 0.0, %v559
    %v561 = vpop.f32.mrb[0].mxu0
    %v562 = vadd.f32 0.0, %v561
    %563 = vdwg.mxu0
    %v564 = vadd.f32 %v338, %v489
    %v565 = vadd.f32 %v340, %v491
    %v566 = vadd.f32 %v409, %v560
    %v567 = vadd.f32 %v411, %v562
    %v568 = vld [vmem:[%s7] sm:$0xf]
    %v570 = vlaneseq
    %v571 = vshrl.u32 %v570, 7
    %v572 = vsub.s32 0, %v571
    %v573 = vrot.slane %v568, %v572
    %v574 = vlaneseq
    %v575 = vshrl.u32 %v574, 7
    %v576 = vsub.s32 1, %v575
    %v577 = vrot.slane %v568, %v576
    %v578 = vlaneseq
    %v579 = vshrl.u32 %v578, 7
    %v580 = vsub.s32 2, %v579
    %v581 = vrot.slane %v568, %v580
    %v582 = vlaneseq
    %v583 = vshrl.u32 %v582, 7
    %v584 = vsub.s32 3, %v583
    %v585 = vrot.slane %v568, %v584
    %v590 = vadd.f32 %v564, %v573
    %v591 = vadd.f32 %v565, %v577
    %v592 = vadd.f32 %v566, %v581
    %v593 = vadd.f32 %v567, %v585
    %v594 = vxor.u32 %v590, 2147483648
    %v595 = vmul.f32 %v594, 1.442695
    %v596 = vpow.pop %v595
    %v597 = vadd.f32 %v596, 1.0
    %v598 = vrcp.pop %v597
    %v599 = vmul.f32 1.0, %v598
    %v600 = vxor.u32 %v591, 2147483648
    %v601 = vmul.f32 %v600, 1.442695
    %v602 = vpow.pop %v601
    %v603 = vadd.f32 %v602, 1.0
    %v604 = vrcp.pop %v603
    %v605 = vmul.f32 1.0, %v604
    %v606 = vxor.u32 %v592, 2147483648
    %v607 = vmul.f32 %v606, 1.442695
    %v608 = vpow.pop %v607
    %v609 = vadd.f32 %v608, 1.0
    %v610 = vrcp.pop %v609
    %v611 = vmul.f32 1.0, %v610
    %v612 = vtanh.pop %v593
    %v613 = vld [vmem:[%s3] sm:$0x3]
    %v614 = vmul.f32 %v611, %v613
    %v615 = vmul.f32 %v599, %v612
    %v616 = vadd.f32 %v614, %v615
    %v617 = vtanh.pop %v616
    %v618 = vmul.f32 %v617, %v605
    %619 = vst [vmem:[#allocation11] sm:$0x3] %v616
    %620 = vst [vmem:[#allocation12] sm:$0x3] %v618
    // Predicated region
    $region54: #{tpu_custom_call.1} parent=1 // pred_check
      _
    $region55: #{tpu_custom_call.1} parent=1 // pred_check_branch
      %622 = sbr.rel (0) target = $region57
    $region56: #{tpu_custom_call.1} parent=1 // pred_region
      %s624 = ssub.s32 32, 32
      %625 = vsyncadd [#allocation4], %s624
      %s627 = sshll.u32 [#allocation11], 4
      %s628 = int_to_ptr.vmem [resolvable:$true] %s627
      %630 = dma.vmem_to_hbm [thread:$0]  %s628, 32, %s8, [#allocation4]
    $region57: #{tpu_custom_call.1} parent=1 // pred_fallthru
      _
    // Predicated region
    $region58: #{tpu_custom_call.1} parent=1 // pred_check
      _
    $region59: #{tpu_custom_call.1} parent=1 // pred_check_branch
      %632 = sbr.rel (0) target = $region61
    $region60: #{tpu_custom_call.1} parent=1 // pred_region
      %s634 = ssub.s32 32, 32
      %635 = vsyncadd [#allocation13], %s634
      %s637 = sshll.u32 [#allocation12], 4
      %s638 = int_to_ptr.vmem [resolvable:$true] %s637
      %640 = dma.vmem_to_hbm [thread:$0]  %s638, 32, %s9, [#allocation13]
    $region61: #{tpu_custom_call.1} parent=1 // pred_fallthru
      _
    // Predicated region
    $region62: #{tpu_custom_call.1} parent=1 // pred_check
      _
    $region63: #{tpu_custom_call.1} parent=1 // pred_check_branch
      %642 = sbr.rel (0) target = $region65
    $region64: #{tpu_custom_call.1} parent=1 // pred_region
      %643 = dma.done [#allocation4], 32
    $region65: #{tpu_custom_call.1} parent=1 // pred_fallthru
      _
    // Predicated region
    $region66: #{tpu_custom_call.1} parent=1 // pred_check
      _
    $region67: #{tpu_custom_call.1} parent=1 // pred_check_branch
      %645 = sbr.rel (0) target = $region69
    $region68: #{tpu_custom_call.1} parent=1 // pred_region
      %646 = dma.done [#allocation13], 32
    $region69: #{tpu_custom_call.1} parent=1 // pred_fallthru
      _
    %647 = vsyncpa [#allocation3], 1
    %648 = vsyncpa [#allocation6], 1
    %649 = vsyncpa [#allocation9], 1
    %650 = vsyncpa [#allocation4], 1
    %651 = vsyncpa [#allocation13], 1

</llo_original>
